<compile_context>
chip_gen: v7x
topology: tpu7x:2x2x1
jax: 0.10.0
libtpu: 0.0.40
codegen_flags: <defaults>
</compile_context>

<pallas_src>
import jax
import jax.numpy as jnp
from jax.experimental import pallas as pl
from jax.experimental.pallas import tpu as pltpu


# ---------------------------------------------------------------------------
# pure-JAX reference (per batch element), mirroring the kernel's bf16 operand
# casts so the comparison checks structure/indexing rather than precision.
# ---------------------------------------------------------------------------
def _ref_forward_one(x, params):
    (w1, b1, s1, t1, w2, b2, s2, t2, w3, b3, s3, t3, w4,
     wg, bg, wth, bth, wph, bph, ww, bw, sw, tw, w5, s5, t5) = params
    f32, bf16 = jnp.float32, jnp.bfloat16
    T, C = x.shape
    inv_t = 1.0 / T
    xb = x.astype(bf16)

    def dconv(w, d):
        z = jnp.zeros((d, C), bf16)
        xp = jnp.concatenate([z, xb, z], axis=0)
        wb = w.astype(bf16)
        acc = jnp.dot(xp[0:T], wb[0], preferred_element_type=f32)
        acc = acc + jnp.dot(xp[d:d + T], wb[1], preferred_element_type=f32)
        acc = acc + jnp.dot(xp[2 * d:2 * d + T], wb[2], preferred_element_type=f32)
        return acc

    out1 = jnp.maximum(dconv(w1, 1) + b1, 0.0) * s1 + t1
    out2 = jnp.maximum(dconv(w2, 2) + b2, 0.0) * s2 + t2
    out3 = jnp.maximum(dconv(w3, 4) + b3, 0.0) * s3 + t3
    out4 = jnp.maximum(jnp.dot(xb, w4.astype(bf16), preferred_element_type=f32), 0.0)

    ob = out4.astype(bf16)
    g_x = jnp.dot(ob, wg.astype(bf16), preferred_element_type=f32) + bg
    th_x = jnp.dot(ob, (wth * inv_t).astype(bf16), preferred_element_type=f32) + bth * inv_t
    ph_x = jnp.dot(ob, wph.astype(bf16), preferred_element_type=f32) + bph
    f = jnp.dot(th_x.astype(bf16), ph_x.astype(bf16).T, preferred_element_type=f32)
    y = jnp.dot(f.astype(bf16), g_x.astype(bf16), preferred_element_type=f32)
    w_y = (jnp.dot(y.astype(bf16), ww.astype(bf16), preferred_element_type=f32)
           + bw) * sw + tw
    z = w_y + out4

    cat = jnp.concatenate([out1, out2, out3, z], axis=1).astype(bf16)
    zc = jnp.zeros((1, cat.shape[1]), bf16)
    cp = jnp.concatenate([zc, cat, zc], axis=0)
    w5b = w5.astype(bf16)
    acc5 = jnp.dot(cp[0:T], w5b[0], preferred_element_type=f32)
    acc5 = acc5 + jnp.dot(cp[1:1 + T], w5b[1], preferred_element_type=f32)
    acc5 = acc5 + jnp.dot(cp[2:2 + T], w5b[2], preferred_element_type=f32)
    out5 = jnp.maximum(acc5, 0.0) * s5 + t5
    return out5 + x.astype(f32)


# ---------------------------------------------------------------------------
# Pallas kernel: block_b batch elements per grid step, wide bf16 matmuls on
# (block_b*T, C), output-side shifts via pltpu.roll + iota masks.
# ---------------------------------------------------------------------------
def aggregate_kernel(x_ref, wbig_ref,
                     b1_ref, s1_ref, t1_ref,
                     b2_ref, s2_ref, t2_ref,
                     b3_ref, s3_ref, t3_ref,
                     wgtp_ref, bgtp_ref,
                     ww_ref, bw_ref, sw_ref, tw_ref,
                     w5p_ref, s5_ref, t5_ref,
                     o_ref):
    f32, bf16 = jnp.float32, jnp.bfloat16
    Bblk, T, C = x_ref.shape
    Co = b1_ref.shape[1]
    Ci = ww_ref.shape[0]
    M = Bblk * T

    x3 = x_ref[...].astype(f32)                 # f32 copy kept for the residual
    xb = x3.astype(bf16).reshape(M, C)          # bf16 MXU operand

    # per-row position within a sequence (for zeroing wrapped rows after roll)
    t_idx = jax.lax.broadcasted_iota(jnp.int32, (Bblk, T, 1), 1).reshape(M, 1)

    def shift_down(p, d):   # out[t] = p[t-d], zeros for t < d (left conv tap)
        return jnp.where(t_idx >= d, pltpu.roll(p, d, 0), 0.0)

    def shift_up(p, d):     # out[t] = p[t+d], zeros for t >= T-d (right tap)
        return jnp.where(t_idx < T - d, pltpu.roll(p, p.shape[0] - d, 0), 0.0)

    # Single fused matmul: every tap of conv_1/2/3 plus conv_4 (N = 10*Co).
    big = jnp.dot(xb, wbig_ref[...], preferred_element_type=f32)   # (M, 10*Co)

    def dilated_branch(idx, d, b_ref, s_ref, t_ref):
        base = 3 * idx * Co
        left = shift_down(big[:, base:base + Co], d)
        cent = big[:, base + Co:base + 2 * Co]
        right = shift_up(big[:, base + 2 * Co:base + 3 * Co], d)
        acc = left + cent + right + b_ref[...]
        # Conv bias -> ReLU -> BN (folded to per-channel scale/shift)
        return jnp.maximum(acc, 0.0) * s_ref[...] + t_ref[...]

    out1 = dilated_branch(0, 1, b1_ref, s1_ref, t1_ref)
    out2 = dilated_branch(1, 2, b2_ref, s2_ref, t2_ref)
    out3 = dilated_branch(2, 4, b3_ref, s3_ref, t3_ref)
    out4 = jnp.maximum(big[:, 9 * Co:10 * Co], 0.0)     # conv_4 (k=1, no bias)

    # --- NONLocalBlock1D (sub_sample=False, bn_layer=True) ------------------
    # fused g / theta / phi projection (1/T already folded into theta).
    gtp = (jnp.dot(out4.astype(bf16), wgtp_ref[...], preferred_element_type=f32)
           + bgtp_ref[...])
    g3 = gtp[:, 0:Ci].astype(bf16).reshape(Bblk, T, Ci)
    th3 = gtp[:, Ci:2 * Ci].astype(bf16).reshape(Bblk, T, Ci)
    ph3 = gtp[:, 2 * Ci:3 * Ci].astype(bf16).reshape(Bblk, T, Ci)

    f_att = jnp.einsum('btc,bsc->bts', th3, ph3,
                       preferred_element_type=f32)              # (Bblk, T, T)
    y = jnp.einsum('bts,bsc->btc', f_att.astype(bf16), g3,
                   preferred_element_type=f32)                  # (Bblk, T, Ci)
    w_y = (jnp.dot(y.reshape(M, Ci).astype(bf16), ww_ref[...],
                   preferred_element_type=f32)
           + bw_ref[...]) * sw_ref[...] + tw_ref[...]
    z = w_y + out4                                              # (M, Co)

    # --- conv_5 without the channel concat ----------------------------------
    # one matmul per input branch (N = 3*C holds all three taps), then the
    # per-tap N-slices are shifted by +-1 row and summed.
    p = jnp.dot(out1.astype(bf16), w5p_ref[0], preferred_element_type=f32)
    p = p + jnp.dot(out2.astype(bf16), w5p_ref[1], preferred_element_type=f32)
    p = p + jnp.dot(out3.astype(bf16), w5p_ref[2], preferred_element_type=f32)
    p = p + jnp.dot(z.astype(bf16), w5p_ref[3], preferred_element_type=f32)

    out5 = jnp.maximum(shift_down(p[:, 0:C], 1) + p[:, C:2 * C]
                       + shift_up(p[:, 2 * C:3 * C], 1),
                       0.0) * s5_ref[...] + t5_ref[...]

    # residual add; the PyTorch permute round-trip is identity in this layout
    o_ref[...] = (out5 + x3.reshape(M, C)).reshape(Bblk, T, C).astype(o_ref.dtype)


# ---------------------------------------------------------------------------
# wrapper: host-side weight fusion (bf16) + pallas_call
# ---------------------------------------------------------------------------
def prepare_weights(params, T):
    (w1, b1, s1, t1, w2, b2, s2, t2, w3, b3, s3, t3, w4,
     wg, bg, wth, bth, wph, bph, ww, bw, sw, tw, w5, s5, t5) = params
    bf16, f32 = jnp.bfloat16, jnp.float32
    C, Co = w4.shape
    inv_t = 1.0 / T

    # all k=1-equivalent projections in one weight: per-branch [L, C, R] taps,
    # then conv_4: (C, 10*Co)
    wbig = jnp.concatenate(
        [w1[0], w1[1], w1[2], w2[0], w2[1], w2[2], w3[0], w3[1], w3[2], w4],
        axis=1).astype(bf16)

    # fused g / theta / phi (theta pre-scaled by 1/T): (Co, 3*Ci)
    wgtp = jnp.concatenate([wg, wth * inv_t, wph], axis=1).astype(bf16)
    bgtp = jnp.concatenate([bg, bth * inv_t, bph], axis=1).astype(f32)

    # conv_5: per Cin-slab, concat the 3 taps along N -> (4, Co, 3*C)
    slabs = []
    for i in range(4):
        sl = slice(i * Co, (i + 1) * Co)
        slabs.append(jnp.concatenate([w5[0, sl, :], w5[1, sl, :], w5[2, sl, :]],
                                     axis=1))
    w5p = jnp.stack(slabs, axis=0).astype(bf16)

    asf = lambda a: a.astype(f32)
    return [
        wbig,
        asf(b1), asf(s1), asf(t1),
        asf(b2), asf(s2), asf(t2),
        asf(b3), asf(s3), asf(t3),
        wgtp, bgtp,
        ww.astype(bf16), asf(bw), asf(sw), asf(tw),
        w5p, asf(s5), asf(t5),
    ]


def _zero_index_map(nd):
    return lambda b: (0,) * nd


def _pick_block_b(B, T, target_rows=512, min_steps=4):
    """Pack batch elements per grid step so matmul M ~ target_rows, but keep at
    least min(B, min_steps) grid steps (>=2 iterations per v7x TensorCore so
    the block DMAs can double-buffer)."""
    bb = max(1, min(B, target_rows // max(T, 1)))
    bb = min(bb, max(1, B // min(B, min_steps)))
    while B % bb:
        bb -= 1
    return max(1, bb)


def aggregate_forward(x, params, block_b=None):
    B, T, C = x.shape
    Co = params[12].shape[1]      # conv_4 weight (C, Co)
    Ci = params[13].shape[1]      # g weight (Co, Ci)
    if block_b is None:
        block_b = _pick_block_b(B, T)
    assert B % block_b == 0, "block_b must divide B"

    kernel_args = prepare_weights(params, T)
    weight_bytes = sum(int(a.size) * a.dtype.itemsize for a in kernel_args)
    M = block_b * T
    grid = (B // block_b,)

    in_specs = [pl.BlockSpec((block_b, T, C), lambda b: (b, 0, 0))]
    in_specs += [pl.BlockSpec(a.shape, _zero_index_map(a.ndim)) for a in kernel_args]
    out_spec = pl.BlockSpec((block_b, T, C), lambda b: (b, 0, 0))

    # explicit VMEM budget: in/out blocks (double-buffered), weights
    # (double-buffered by the pipeline) and the major temporaries, ~2x headroom
    io_bytes = 2 * 2 * M * C * 4
    act_bytes = (M * (10 * Co + 7 * Co + 3 * Ci + 5 * C) * 4
                 + 2 * block_b * T * T * 4)
    need = 2 * weight_bytes + io_bytes + act_bytes
    vmem_limit = int(min(64 << 20, max(16 << 20, 2 * need)))

    flops = B * (2 * T * C * 10 * Co        # fused taps + conv_4
                 + 2 * T * Co * 3 * Ci      # g / theta / phi
                 + 2 * 2 * T * T * Ci       # attention form + apply
                 + 2 * T * Ci * Co          # W projection
                 + 4 * 2 * T * Co * 3 * C)  # conv_5
    bytes_accessed = int(2 * B * T * C * x.dtype.itemsize
                         + grid[0] * weight_bytes)

    return pl.pallas_call(
        aggregate_kernel,
        out_shape=jax.ShapeDtypeStruct((B, T, C), x.dtype),
        grid_spec=pl.GridSpec(
            grid=grid,
            in_specs=in_specs,
            out_specs=out_spec,
        ),
        compiler_params=pltpu.CompilerParams(
            dimension_semantics=("parallel",),
            vmem_limit_bytes=vmem_limit),
        cost_estimate=pl.CostEstimate(
            flops=int(flops), transcendentals=0,
            bytes_accessed=bytes_accessed),
    )(x, *kernel_args)


# ---------------------------------------------------------------------------
# deterministic parameter construction (eval-mode BN folded from running stats)
# ---------------------------------------------------------------------------
def make_params(key, C, dtype=jnp.float32):
    Co = C // 4           # out_channels of conv_1..4
    Ci = max(Co // 2, 1)  # inter_channels of the non-local block
    keys = iter(jax.random.split(key, 64))

    def rnd(shape, scale=0.05):
        return (scale * jax.random.normal(next(keys), shape)).astype(dtype)

    def bn(n, eps=1e-5):
        gamma = (1.0 + 0.2 * jax.random.normal(next(keys), (1, n))).astype(dtype)
        beta = (0.1 * jax.random.normal(next(keys), (1, n))).astype(dtype)
        mean = (0.1 * jax.random.normal(next(keys), (1, n))).astype(dtype)
        var = (0.5 + jax.random.uniform(next(keys), (1, n))).astype(dtype)
        s = gamma / jnp.sqrt(var + eps)
        t = beta - mean * s
        return s, t

    s1, t1 = bn(Co)
    s2, t2 = bn(Co)
    s3, t3 = bn(Co)
    # PyTorch fresh-init zeroes the W-block BN (gamma=0, beta=0); use non-zero
    # folded params here so the non-local attention path is actually validated.
    sw, tw = bn(Co)
    s5, t5 = bn(C)

    params = [
        # conv_1 (dil=1): (3, Cin, Cout) = torch (Cout, Cin, 3) transposed per tap
        rnd((3, C, Co)), rnd((1, Co)), s1, t1,
        # conv_2 (dil=2)
        rnd((3, C, Co)), rnd((1, Co)), s2, t2,
        # conv_3 (dil=4)
        rnd((3, C, Co)), rnd((1, Co)), s3, t3,
        # conv_4 (k=1, no bias)
        rnd((C, Co)),
        # non-local: g / theta / phi (k=1 convs)
        rnd((Co, Ci)), rnd((1, Ci)),
        rnd((Co, Ci)), rnd((1, Ci)),
        rnd((Co, Ci)), rnd((1, Ci)),
        # non-local W conv + folded BN
        rnd((Ci, Co)), rnd((1, Co)), sw, tw,
        # conv_5 (k=3, no bias) + folded BN
        rnd((3, C, C)), s5, t5,
    ]
    return params


# ---------------------------------------------------------------------------
if __name__ == "__main__":
    # small analog of Model_BERT's Aggregate input (bs*ncrops, T, len_feature)
    # NOTE: real shapes are C=2048, Co=512, Ci=256, T>=32 — the toy channel
    # sizes keep the demo fast but under-fill the MXU lanes.
    B, T, C = 8, 16, 64
    key = jax.random.PRNGKey(0)
    kx, kp = jax.random.split(key)

    x = jax.random.normal(kx, (B, T, C), dtype=jnp.float32)
    params = make_params(kp, C)

    out = aggregate_forward(x, params)
    out = jax.block_until_ready(out)

    ref = jax.vmap(lambda xe: _ref_forward_one(xe, params))(x)
    ref = jax.block_until_ready(ref)

    assert out.shape == (B, T, C)
    max_err = float(jnp.max(jnp.abs(out - ref)))
    assert bool(jnp.allclose(out, ref, atol=2e-3, rtol=2e-3)), (
        f"mismatch vs reference (max abs err {max_err})")

    print("KERNEL_OK")
</pallas_src>

<mosaic_0001>
module attributes {stable_mosaic.version = 11 : i64} {
  func.func @aggregate_kernel(%arg0: i32, %arg1: memref<2x16x64xf32, #tpu.memory_space<vmem>>, %arg2: memref<64x160xbf16, #tpu.memory_space<vmem>>, %arg3: memref<1x16xf32, #tpu.memory_space<vmem>>, %arg4: memref<1x16xf32, #tpu.memory_space<vmem>>, %arg5: memref<1x16xf32, #tpu.memory_space<vmem>>, %arg6: memref<1x16xf32, #tpu.memory_space<vmem>>, %arg7: memref<1x16xf32, #tpu.memory_space<vmem>>, %arg8: memref<1x16xf32, #tpu.memory_space<vmem>>, %arg9: memref<1x16xf32, #tpu.memory_space<vmem>>, %arg10: memref<1x16xf32, #tpu.memory_space<vmem>>, %arg11: memref<1x16xf32, #tpu.memory_space<vmem>>, %arg12: memref<16x24xbf16, #tpu.memory_space<vmem>>, %arg13: memref<1x24xf32, #tpu.memory_space<vmem>>, %arg14: memref<8x16xbf16, #tpu.memory_space<vmem>>, %arg15: memref<1x16xf32, #tpu.memory_space<vmem>>, %arg16: memref<1x16xf32, #tpu.memory_space<vmem>>, %arg17: memref<1x16xf32, #tpu.memory_space<vmem>>, %arg18: memref<4x16x192xbf16, #tpu.memory_space<vmem>>, %arg19: memref<1x64xf32, #tpu.memory_space<vmem>>, %arg20: memref<1x64xf32, #tpu.memory_space<vmem>>, %arg21: memref<2x16x64xf32, #tpu.memory_space<vmem>>) attributes {dimension_semantics = [#tpu.dimension_semantics<parallel>], iteration_bounds = array<i64: 4>, scalar_prefetch = 0 : i64, scratch_operands = 0 : i64, tpu.core_type = #tpu.core_type<tc>, window_params = [{transform_indices = @transform_0, window_bounds = array<i64: 2, 16, 64>}, {pipeline_mode = #tpu.pipeline_mode<synchronous>, transform_indices = @transform_1, window_bounds = array<i64: 64, 160>}, {pipeline_mode = #tpu.pipeline_mode<synchronous>, transform_indices = @transform_2, window_bounds = array<i64: 1, 16>}, {pipeline_mode = #tpu.pipeline_mode<synchronous>, transform_indices = @transform_3, window_bounds = array<i64: 1, 16>}, {pipeline_mode = #tpu.pipeline_mode<synchronous>, transform_indices = @transform_4, window_bounds = array<i64: 1, 16>}, {pipeline_mode = #tpu.pipeline_mode<synchronous>, transform_indices = @transform_5, window_bounds = array<i64: 1, 16>}, {pipeline_mode = #tpu.pipeline_mode<synchronous>, transform_indices = @transform_6, window_bounds = array<i64: 1, 16>}, {pipeline_mode = #tpu.pipeline_mode<synchronous>, transform_indices = @transform_7, window_bounds = array<i64: 1, 16>}, {pipeline_mode = #tpu.pipeline_mode<synchronous>, transform_indices = @transform_8, window_bounds = array<i64: 1, 16>}, {pipeline_mode = #tpu.pipeline_mode<synchronous>, transform_indices = @transform_9, window_bounds = array<i64: 1, 16>}, {pipeline_mode = #tpu.pipeline_mode<synchronous>, transform_indices = @transform_10, window_bounds = array<i64: 1, 16>}, {pipeline_mode = #tpu.pipeline_mode<synchronous>, transform_indices = @transform_11, window_bounds = array<i64: 16, 24>}, {pipeline_mode = #tpu.pipeline_mode<synchronous>, transform_indices = @transform_12, window_bounds = array<i64: 1, 24>}, {pipeline_mode = #tpu.pipeline_mode<synchronous>, transform_indices = @transform_13, window_bounds = array<i64: 8, 16>}, {pipeline_mode = #tpu.pipeline_mode<synchronous>, transform_indices = @transform_14, window_bounds = array<i64: 1, 16>}, {pipeline_mode = #tpu.pipeline_mode<synchronous>, transform_indices = @transform_15, window_bounds = array<i64: 1, 16>}, {pipeline_mode = #tpu.pipeline_mode<synchronous>, transform_indices = @transform_16, window_bounds = array<i64: 1, 16>}, {pipeline_mode = #tpu.pipeline_mode<synchronous>, transform_indices = @transform_17, window_bounds = array<i64: 4, 16, 192>}, {pipeline_mode = #tpu.pipeline_mode<synchronous>, transform_indices = @transform_18, window_bounds = array<i64: 1, 64>}, {pipeline_mode = #tpu.pipeline_mode<synchronous>, transform_indices = @transform_19, window_bounds = array<i64: 1, 64>}, {transform_indices = @transform_20, window_bounds = array<i64: 2, 16, 64>}]} {
    %c0 = arith.constant 0 : index
    %c0_0 = arith.constant 0 : index
    %c0_1 = arith.constant 0 : index
    %0 = vector.load %arg1[%c0, %c0_0, %c0_1] : memref<2x16x64xf32, #tpu.memory_space<vmem>>, vector<2x16x64xf32>
    %1 = arith.truncf %0 : vector<2x16x64xf32> to vector<2x16x64xbf16>
    %2 = vector.shape_cast %1 : vector<2x16x64xbf16> to vector<32x64xbf16>
    %3 = tpu.iota {dimensions = array<i32: 1>} : vector<2x16x1xi32>
    %4 = vector.shape_cast %3 : vector<2x16x1xi32> to vector<32x1xi32>
    %c0_2 = arith.constant 0 : index
    %c0_3 = arith.constant 0 : index
    %5 = vector.load %arg2[%c0_2, %c0_3] : memref<64x160xbf16, #tpu.memory_space<vmem>>, vector<64x160xbf16>
    %cst = arith.constant dense<0.000000e+00> : vector<32x160xf32>
    %6 = tpu.matmul %2, %5, %cst {dimension_numbers = #tpu.dot_dimension_numbers<[1], [0], [0], [1], [0, 0, 1, 1], [], []>} : vector<32x64xbf16>, vector<64x160xbf16>, vector<32x160xf32> -> vector<32x160xf32>
    %7 = vector.extract_strided_slice %6 {offsets = [0, 0], sizes = [32, 16], strides = [1, 1]} : vector<32x160xf32> to vector<32x16xf32>
    %c1_i32 = arith.constant 1 : i32
    %8 = vector.broadcast %c1_i32 : i32 to vector<32x1xi32>
    %9 = arith.cmpi sge, %4, %8 : vector<32x1xi32>
    %c1_i32_4 = arith.constant 1 : i32
    %10 = tpu.dynamic_rotate %7 by %c1_i32_4 dim 0 : vector<32x16xf32>, i32 -> vector<32x16xf32>
    %cst_5 = arith.constant 0.000000e+00 : f32
    %11 = vector.shape_cast %9 : vector<32x1xi1> to vector<32x1xi1>
    %12 = vector.broadcast %11 : vector<32x1xi1> to vector<32x16xi1>
    %13 = vector.broadcast %cst_5 : f32 to vector<32x16xf32>
    %14 = arith.select %12, %10, %13 : vector<32x16xi1>, vector<32x16xf32>
    %15 = vector.extract_strided_slice %6 {offsets = [0, 16], sizes = [32, 16], strides = [1, 1]} : vector<32x160xf32> to vector<32x16xf32>
    %16 = vector.extract_strided_slice %6 {offsets = [0, 32], sizes = [32, 16], strides = [1, 1]} : vector<32x160xf32> to vector<32x16xf32>
    %c15_i32 = arith.constant 15 : i32
    %17 = vector.broadcast %c15_i32 : i32 to vector<32x1xi32>
    %18 = arith.cmpi slt, %4, %17 : vector<32x1xi32>
    %c31_i32 = arith.constant 31 : i32
    %19 = tpu.dynamic_rotate %16 by %c31_i32 dim 0 : vector<32x16xf32>, i32 -> vector<32x16xf32>
    %cst_6 = arith.constant 0.000000e+00 : f32
    %20 = vector.shape_cast %18 : vector<32x1xi1> to vector<32x1xi1>
    %21 = vector.broadcast %20 : vector<32x1xi1> to vector<32x16xi1>
    %22 = vector.broadcast %cst_6 : f32 to vector<32x16xf32>
    %23 = arith.select %21, %19, %22 : vector<32x16xi1>, vector<32x16xf32>
    %24 = arith.addf %14, %15 : vector<32x16xf32>
    %25 = arith.addf %24, %23 : vector<32x16xf32>
    %c0_7 = arith.constant 0 : index
    %c0_8 = arith.constant 0 : index
    %26 = vector.load %arg3[%c0_7, %c0_8] : memref<1x16xf32, #tpu.memory_space<vmem>>, vector<1x16xf32>
    %27 = vector.broadcast %26 : vector<1x16xf32> to vector<32x16xf32>
    %28 = arith.addf %25, %27 : vector<32x16xf32>
    %cst_9 = arith.constant 0.000000e+00 : f32
    %29 = vector.broadcast %cst_9 : f32 to vector<32x16xf32>
    %30 = arith.maximumf %28, %29 : vector<32x16xf32>
    %c0_10 = arith.constant 0 : index
    %c0_11 = arith.constant 0 : index
    %31 = vector.load %arg4[%c0_10, %c0_11] : memref<1x16xf32, #tpu.memory_space<vmem>>, vector<1x16xf32>
    %32 = vector.broadcast %31 : vector<1x16xf32> to vector<32x16xf32>
    %33 = arith.mulf %30, %32 : vector<32x16xf32>
    %c0_12 = arith.constant 0 : index
    %c0_13 = arith.constant 0 : index
    %34 = vector.load %arg5[%c0_12, %c0_13] : memref<1x16xf32, #tpu.memory_space<vmem>>, vector<1x16xf32>
    %35 = vector.broadcast %34 : vector<1x16xf32> to vector<32x16xf32>
    %36 = arith.addf %33, %35 : vector<32x16xf32>
    %37 = vector.extract_strided_slice %6 {offsets = [0, 48], sizes = [32, 16], strides = [1, 1]} : vector<32x160xf32> to vector<32x16xf32>
    %c2_i32 = arith.constant 2 : i32
    %38 = vector.broadcast %c2_i32 : i32 to vector<32x1xi32>
    %39 = arith.cmpi sge, %4, %38 : vector<32x1xi32>
    %c2_i32_14 = arith.constant 2 : i32
    %40 = tpu.dynamic_rotate %37 by %c2_i32_14 dim 0 : vector<32x16xf32>, i32 -> vector<32x16xf32>
    %cst_15 = arith.constant 0.000000e+00 : f32
    %41 = vector.shape_cast %39 : vector<32x1xi1> to vector<32x1xi1>
    %42 = vector.broadcast %41 : vector<32x1xi1> to vector<32x16xi1>
    %43 = vector.broadcast %cst_15 : f32 to vector<32x16xf32>
    %44 = arith.select %42, %40, %43 : vector<32x16xi1>, vector<32x16xf32>
    %45 = vector.extract_strided_slice %6 {offsets = [0, 64], sizes = [32, 16], strides = [1, 1]} : vector<32x160xf32> to vector<32x16xf32>
    %46 = vector.extract_strided_slice %6 {offsets = [0, 80], sizes = [32, 16], strides = [1, 1]} : vector<32x160xf32> to vector<32x16xf32>
    %c14_i32 = arith.constant 14 : i32
    %47 = vector.broadcast %c14_i32 : i32 to vector<32x1xi32>
    %48 = arith.cmpi slt, %4, %47 : vector<32x1xi32>
    %c30_i32 = arith.constant 30 : i32
    %49 = tpu.dynamic_rotate %46 by %c30_i32 dim 0 : vector<32x16xf32>, i32 -> vector<32x16xf32>
    %cst_16 = arith.constant 0.000000e+00 : f32
    %50 = vector.shape_cast %48 : vector<32x1xi1> to vector<32x1xi1>
    %51 = vector.broadcast %50 : vector<32x1xi1> to vector<32x16xi1>
    %52 = vector.broadcast %cst_16 : f32 to vector<32x16xf32>
    %53 = arith.select %51, %49, %52 : vector<32x16xi1>, vector<32x16xf32>
    %54 = arith.addf %44, %45 : vector<32x16xf32>
    %55 = arith.addf %54, %53 : vector<32x16xf32>
    %c0_17 = arith.constant 0 : index
    %c0_18 = arith.constant 0 : index
    %56 = vector.load %arg6[%c0_17, %c0_18] : memref<1x16xf32, #tpu.memory_space<vmem>>, vector<1x16xf32>
    %57 = vector.broadcast %56 : vector<1x16xf32> to vector<32x16xf32>
    %58 = arith.addf %55, %57 : vector<32x16xf32>
    %cst_19 = arith.constant 0.000000e+00 : f32
    %59 = vector.broadcast %cst_19 : f32 to vector<32x16xf32>
    %60 = arith.maximumf %58, %59 : vector<32x16xf32>
    %c0_20 = arith.constant 0 : index
    %c0_21 = arith.constant 0 : index
    %61 = vector.load %arg7[%c0_20, %c0_21] : memref<1x16xf32, #tpu.memory_space<vmem>>, vector<1x16xf32>
    %62 = vector.broadcast %61 : vector<1x16xf32> to vector<32x16xf32>
    %63 = arith.mulf %60, %62 : vector<32x16xf32>
    %c0_22 = arith.constant 0 : index
    %c0_23 = arith.constant 0 : index
    %64 = vector.load %arg8[%c0_22, %c0_23] : memref<1x16xf32, #tpu.memory_space<vmem>>, vector<1x16xf32>
    %65 = vector.broadcast %64 : vector<1x16xf32> to vector<32x16xf32>
    %66 = arith.addf %63, %65 : vector<32x16xf32>
    %67 = vector.extract_strided_slice %6 {offsets = [0, 96], sizes = [32, 16], strides = [1, 1]} : vector<32x160xf32> to vector<32x16xf32>
    %c4_i32 = arith.constant 4 : i32
    %68 = vector.broadcast %c4_i32 : i32 to vector<32x1xi32>
    %69 = arith.cmpi sge, %4, %68 : vector<32x1xi32>
    %c4_i32_24 = arith.constant 4 : i32
    %70 = tpu.dynamic_rotate %67 by %c4_i32_24 dim 0 : vector<32x16xf32>, i32 -> vector<32x16xf32>
    %cst_25 = arith.constant 0.000000e+00 : f32
    %71 = vector.shape_cast %69 : vector<32x1xi1> to vector<32x1xi1>
    %72 = vector.broadcast %71 : vector<32x1xi1> to vector<32x16xi1>
    %73 = vector.broadcast %cst_25 : f32 to vector<32x16xf32>
    %74 = arith.select %72, %70, %73 : vector<32x16xi1>, vector<32x16xf32>
    %75 = vector.extract_strided_slice %6 {offsets = [0, 112], sizes = [32, 16], strides = [1, 1]} : vector<32x160xf32> to vector<32x16xf32>
    %76 = vector.extract_strided_slice %6 {offsets = [0, 128], sizes = [32, 16], strides = [1, 1]} : vector<32x160xf32> to vector<32x16xf32>
    %c12_i32 = arith.constant 12 : i32
    %77 = vector.broadcast %c12_i32 : i32 to vector<32x1xi32>
    %78 = arith.cmpi slt, %4, %77 : vector<32x1xi32>
    %c28_i32 = arith.constant 28 : i32
    %79 = tpu.dynamic_rotate %76 by %c28_i32 dim 0 : vector<32x16xf32>, i32 -> vector<32x16xf32>
    %cst_26 = arith.constant 0.000000e+00 : f32
    %80 = vector.shape_cast %78 : vector<32x1xi1> to vector<32x1xi1>
    %81 = vector.broadcast %80 : vector<32x1xi1> to vector<32x16xi1>
    %82 = vector.broadcast %cst_26 : f32 to vector<32x16xf32>
    %83 = arith.select %81, %79, %82 : vector<32x16xi1>, vector<32x16xf32>
    %84 = arith.addf %74, %75 : vector<32x16xf32>
    %85 = arith.addf %84, %83 : vector<32x16xf32>
    %c0_27 = arith.constant 0 : index
    %c0_28 = arith.constant 0 : index
    %86 = vector.load %arg9[%c0_27, %c0_28] : memref<1x16xf32, #tpu.memory_space<vmem>>, vector<1x16xf32>
    %87 = vector.broadcast %86 : vector<1x16xf32> to vector<32x16xf32>
    %88 = arith.addf %85, %87 : vector<32x16xf32>
    %cst_29 = arith.constant 0.000000e+00 : f32
    %89 = vector.broadcast %cst_29 : f32 to vector<32x16xf32>
    %90 = arith.maximumf %88, %89 : vector<32x16xf32>
    %c0_30 = arith.constant 0 : index
    %c0_31 = arith.constant 0 : index
    %91 = vector.load %arg10[%c0_30, %c0_31] : memref<1x16xf32, #tpu.memory_space<vmem>>, vector<1x16xf32>
    %92 = vector.broadcast %91 : vector<1x16xf32> to vector<32x16xf32>
    %93 = arith.mulf %90, %92 : vector<32x16xf32>
    %c0_32 = arith.constant 0 : index
    %c0_33 = arith.constant 0 : index
    %94 = vector.load %arg11[%c0_32, %c0_33] : memref<1x16xf32, #tpu.memory_space<vmem>>, vector<1x16xf32>
    %95 = vector.broadcast %94 : vector<1x16xf32> to vector<32x16xf32>
    %96 = arith.addf %93, %95 : vector<32x16xf32>
    %97 = vector.extract_strided_slice %6 {offsets = [0, 144], sizes = [32, 16], strides = [1, 1]} : vector<32x160xf32> to vector<32x16xf32>
    %cst_34 = arith.constant 0.000000e+00 : f32
    %98 = vector.broadcast %cst_34 : f32 to vector<32x16xf32>
    %99 = arith.maximumf %97, %98 : vector<32x16xf32>
    %100 = arith.truncf %99 : vector<32x16xf32> to vector<32x16xbf16>
    %c0_35 = arith.constant 0 : index
    %c0_36 = arith.constant 0 : index
    %101 = vector.load %arg12[%c0_35, %c0_36] : memref<16x24xbf16, #tpu.memory_space<vmem>>, vector<16x24xbf16>
    %cst_37 = arith.constant dense<0.000000e+00> : vector<32x24xf32>
    %102 = tpu.matmul %100, %101, %cst_37 {dimension_numbers = #tpu.dot_dimension_numbers<[1], [0], [0], [1], [0, 0, 1, 1], [], []>} : vector<32x16xbf16>, vector<16x24xbf16>, vector<32x24xf32> -> vector<32x24xf32>
    %c0_38 = arith.constant 0 : index
    %c0_39 = arith.constant 0 : index
    %103 = vector.load %arg13[%c0_38, %c0_39] : memref<1x24xf32, #tpu.memory_space<vmem>>, vector<1x24xf32>
    %104 = vector.broadcast %103 : vector<1x24xf32> to vector<32x24xf32>
    %105 = arith.addf %102, %104 : vector<32x24xf32>
    %106 = vector.extract_strided_slice %105 {offsets = [0, 0], sizes = [32, 8], strides = [1, 1]} : vector<32x24xf32> to vector<32x8xf32>
    %107 = arith.truncf %106 : vector<32x8xf32> to vector<32x8xbf16>
    %108 = vector.shape_cast %107 : vector<32x8xbf16> to vector<2x16x8xbf16>
    %109 = vector.extract_strided_slice %105 {offsets = [0, 8], sizes = [32, 8], strides = [1, 1]} : vector<32x24xf32> to vector<32x8xf32>
    %110 = arith.truncf %109 : vector<32x8xf32> to vector<32x8xbf16>
    %111 = vector.shape_cast %110 : vector<32x8xbf16> to vector<2x16x8xbf16>
    %112 = vector.extract_strided_slice %105 {offsets = [0, 16], sizes = [32, 8], strides = [1, 1]} : vector<32x24xf32> to vector<32x8xf32>
    %113 = arith.truncf %112 : vector<32x8xf32> to vector<32x8xbf16>
    %114 = vector.shape_cast %113 : vector<32x8xbf16> to vector<2x16x8xbf16>
    "tpu.trace_start"() <{level = 10 : i32, message = "btc,bsc->bts"}> : () -> ()
    %cst_40 = arith.constant dense<0.000000e+00> : vector<2x16x16xf32>
    %115 = tpu.matmul %111, %114, %cst_40 {dimension_numbers = #tpu.dot_dimension_numbers<[2], [2], [1], [1], [0, 0, 0, 1, 1, 1], [0], [0]>} : vector<2x16x8xbf16>, vector<2x16x8xbf16>, vector<2x16x16xf32> -> vector<2x16x16xf32>
    "tpu.trace_stop"() : () -> ()
    %116 = arith.truncf %115 : vector<2x16x16xf32> to vector<2x16x16xbf16>
    "tpu.trace_start"() <{level = 10 : i32, message = "bts,bsc->btc"}> : () -> ()
    %cst_41 = arith.constant dense<0.000000e+00> : vector<2x16x8xf32>
    %117 = tpu.matmul %116, %108, %cst_41 {dimension_numbers = #tpu.dot_dimension_numbers<[2], [1], [1], [2], [0, 0, 0, 1, 1, 2], [0], [0]>} : vector<2x16x16xbf16>, vector<2x16x8xbf16>, vector<2x16x8xf32> -> vector<2x16x8xf32>
    "tpu.trace_stop"() : () -> ()
    %118 = vector.shape_cast %117 : vector<2x16x8xf32> to vector<32x8xf32>
    %119 = arith.truncf %118 : vector<32x8xf32> to vector<32x8xbf16>
    %c0_42 = arith.constant 0 : index
    %c0_43 = arith.constant 0 : index
    %120 = vector.load %arg14[%c0_42, %c0_43] : memref<8x16xbf16, #tpu.memory_space<vmem>>, vector<8x16xbf16>
    %cst_44 = arith.constant dense<0.000000e+00> : vector<32x16xf32>
    %121 = tpu.matmul %119, %120, %cst_44 {dimension_numbers = #tpu.dot_dimension_numbers<[1], [0], [0], [1], [0, 0, 1, 1], [], []>} : vector<32x8xbf16>, vector<8x16xbf16>, vector<32x16xf32> -> vector<32x16xf32>
    %c0_45 = arith.constant 0 : index
    %c0_46 = arith.constant 0 : index
    %122 = vector.load %arg15[%c0_45, %c0_46] : memref<1x16xf32, #tpu.memory_space<vmem>>, vector<1x16xf32>
    %123 = vector.broadcast %122 : vector<1x16xf32> to vector<32x16xf32>
    %124 = arith.addf %121, %123 : vector<32x16xf32>
    %c0_47 = arith.constant 0 : index
    %c0_48 = arith.constant 0 : index
    %125 = vector.load %arg16[%c0_47, %c0_48] : memref<1x16xf32, #tpu.memory_space<vmem>>, vector<1x16xf32>
    %126 = vector.broadcast %125 : vector<1x16xf32> to vector<32x16xf32>
    %127 = arith.mulf %124, %126 : vector<32x16xf32>
    %c0_49 = arith.constant 0 : index
    %c0_50 = arith.constant 0 : index
    %128 = vector.load %arg17[%c0_49, %c0_50] : memref<1x16xf32, #tpu.memory_space<vmem>>, vector<1x16xf32>
    %129 = vector.broadcast %128 : vector<1x16xf32> to vector<32x16xf32>
    %130 = arith.addf %127, %129 : vector<32x16xf32>
    %131 = arith.addf %130, %99 : vector<32x16xf32>
    %132 = arith.truncf %36 : vector<32x16xf32> to vector<32x16xbf16>
    %c0_51 = arith.constant 0 : index
    %c0_52 = arith.constant 0 : index
    %c0_53 = arith.constant 0 : index
    %133 = vector.load %arg18[%c0_51, %c0_52, %c0_53] : memref<4x16x192xbf16, #tpu.memory_space<vmem>>, vector<1x16x192xbf16>
    %134 = vector.shape_cast %133 : vector<1x16x192xbf16> to vector<16x192xbf16>
    %cst_54 = arith.constant dense<0.000000e+00> : vector<32x192xf32>
    %135 = tpu.matmul %132, %134, %cst_54 {dimension_numbers = #tpu.dot_dimension_numbers<[1], [0], [0], [1], [0, 0, 1, 1], [], []>} : vector<32x16xbf16>, vector<16x192xbf16>, vector<32x192xf32> -> vector<32x192xf32>
    %136 = arith.truncf %66 : vector<32x16xf32> to vector<32x16xbf16>
    %c1 = arith.constant 1 : index
    %c0_55 = arith.constant 0 : index
    %c0_56 = arith.constant 0 : index
    %137 = vector.load %arg18[%c1, %c0_55, %c0_56] : memref<4x16x192xbf16, #tpu.memory_space<vmem>>, vector<1x16x192xbf16>
    %138 = vector.shape_cast %137 : vector<1x16x192xbf16> to vector<16x192xbf16>
    %cst_57 = arith.constant dense<0.000000e+00> : vector<32x192xf32>
    %139 = tpu.matmul %136, %138, %cst_57 {dimension_numbers = #tpu.dot_dimension_numbers<[1], [0], [0], [1], [0, 0, 1, 1], [], []>} : vector<32x16xbf16>, vector<16x192xbf16>, vector<32x192xf32> -> vector<32x192xf32>
    %140 = arith.addf %135, %139 : vector<32x192xf32>
    %141 = arith.truncf %96 : vector<32x16xf32> to vector<32x16xbf16>
    %c2 = arith.constant 2 : index
    %c0_58 = arith.constant 0 : index
    %c0_59 = arith.constant 0 : index
    %142 = vector.load %arg18[%c2, %c0_58, %c0_59] : memref<4x16x192xbf16, #tpu.memory_space<vmem>>, vector<1x16x192xbf16>
    %143 = vector.shape_cast %142 : vector<1x16x192xbf16> to vector<16x192xbf16>
    %cst_60 = arith.constant dense<0.000000e+00> : vector<32x192xf32>
    %144 = tpu.matmul %141, %143, %cst_60 {dimension_numbers = #tpu.dot_dimension_numbers<[1], [0], [0], [1], [0, 0, 1, 1], [], []>} : vector<32x16xbf16>, vector<16x192xbf16>, vector<32x192xf32> -> vector<32x192xf32>
    %145 = arith.addf %140, %144 : vector<32x192xf32>
    %146 = arith.truncf %131 : vector<32x16xf32> to vector<32x16xbf16>
    %c3 = arith.constant 3 : index
    %c0_61 = arith.constant 0 : index
    %c0_62 = arith.constant 0 : index
    %147 = vector.load %arg18[%c3, %c0_61, %c0_62] : memref<4x16x192xbf16, #tpu.memory_space<vmem>>, vector<1x16x192xbf16>
    %148 = vector.shape_cast %147 : vector<1x16x192xbf16> to vector<16x192xbf16>
    %cst_63 = arith.constant dense<0.000000e+00> : vector<32x192xf32>
    %149 = tpu.matmul %146, %148, %cst_63 {dimension_numbers = #tpu.dot_dimension_numbers<[1], [0], [0], [1], [0, 0, 1, 1], [], []>} : vector<32x16xbf16>, vector<16x192xbf16>, vector<32x192xf32> -> vector<32x192xf32>
    %150 = arith.addf %145, %149 : vector<32x192xf32>
    %151 = vector.extract_strided_slice %150 {offsets = [0, 0], sizes = [32, 64], strides = [1, 1]} : vector<32x192xf32> to vector<32x64xf32>
    %c1_i32_64 = arith.constant 1 : i32
    %152 = vector.broadcast %c1_i32_64 : i32 to vector<32x1xi32>
    %153 = arith.cmpi sge, %4, %152 : vector<32x1xi32>
    %c1_i32_65 = arith.constant 1 : i32
    %154 = tpu.dynamic_rotate %151 by %c1_i32_65 dim 0 : vector<32x64xf32>, i32 -> vector<32x64xf32>
    %cst_66 = arith.constant 0.000000e+00 : f32
    %155 = vector.shape_cast %153 : vector<32x1xi1> to vector<32x1xi1>
    %156 = vector.broadcast %155 : vector<32x1xi1> to vector<32x64xi1>
    %157 = vector.broadcast %cst_66 : f32 to vector<32x64xf32>
    %158 = arith.select %156, %154, %157 : vector<32x64xi1>, vector<32x64xf32>
    %159 = vector.extract_strided_slice %150 {offsets = [0, 64], sizes = [32, 64], strides = [1, 1]} : vector<32x192xf32> to vector<32x64xf32>
    %160 = arith.addf %158, %159 : vector<32x64xf32>
    %161 = vector.extract_strided_slice %150 {offsets = [0, 128], sizes = [32, 64], strides = [1, 1]} : vector<32x192xf32> to vector<32x64xf32>
    %c15_i32_67 = arith.constant 15 : i32
    %162 = vector.broadcast %c15_i32_67 : i32 to vector<32x1xi32>
    %163 = arith.cmpi slt, %4, %162 : vector<32x1xi32>
    %c31_i32_68 = arith.constant 31 : i32
    %164 = tpu.dynamic_rotate %161 by %c31_i32_68 dim 0 : vector<32x64xf32>, i32 -> vector<32x64xf32>
    %cst_69 = arith.constant 0.000000e+00 : f32
    %165 = vector.shape_cast %163 : vector<32x1xi1> to vector<32x1xi1>
    %166 = vector.broadcast %165 : vector<32x1xi1> to vector<32x64xi1>
    %167 = vector.broadcast %cst_69 : f32 to vector<32x64xf32>
    %168 = arith.select %166, %164, %167 : vector<32x64xi1>, vector<32x64xf32>
    %169 = arith.addf %160, %168 : vector<32x64xf32>
    %cst_70 = arith.constant 0.000000e+00 : f32
    %170 = vector.broadcast %cst_70 : f32 to vector<32x64xf32>
    %171 = arith.maximumf %169, %170 : vector<32x64xf32>
    %c0_71 = arith.constant 0 : index
    %c0_72 = arith.constant 0 : index
    %172 = vector.load %arg19[%c0_71, %c0_72] : memref<1x64xf32, #tpu.memory_space<vmem>>, vector<1x64xf32>
    %173 = vector.broadcast %172 : vector<1x64xf32> to vector<32x64xf32>
    %174 = arith.mulf %171, %173 : vector<32x64xf32>
    %c0_73 = arith.constant 0 : index
    %c0_74 = arith.constant 0 : index
    %175 = vector.load %arg20[%c0_73, %c0_74] : memref<1x64xf32, #tpu.memory_space<vmem>>, vector<1x64xf32>
    %176 = vector.broadcast %175 : vector<1x64xf32> to vector<32x64xf32>
    %177 = arith.addf %174, %176 : vector<32x64xf32>
    %178 = vector.shape_cast %0 : vector<2x16x64xf32> to vector<32x64xf32>
    %179 = arith.addf %177, %178 : vector<32x64xf32>
    %180 = vector.shape_cast %179 : vector<32x64xf32> to vector<2x16x64xf32>
    %c0_75 = arith.constant 0 : index
    %c0_76 = arith.constant 0 : index
    %c0_77 = arith.constant 0 : index
    %181 = vector.load %arg21[%c0_75, %c0_76, %c0_77] : memref<2x16x64xf32, #tpu.memory_space<vmem>>, vector<2x16x64xf32>
    tpu.vector_store %arg21[%c0_75, %c0_76, %c0_77], %180 {strides = array<i32>} : memref<2x16x64xf32, #tpu.memory_space<vmem>>, vector<2x16x64xf32>,
    return
  }
  func.func @transform_0(%arg0: i32) -> (i32, i32, i32) {
    %c0_i32 = arith.constant 0 : i32
    %c0_i32_0 = arith.constant 0 : i32
    %c0_i32_1 = arith.constant 0 : i32
    return %arg0, %c0_i32, %c0_i32_0 : i32, i32, i32
  }
  func.func @transform_1(%arg0: i32) -> (i32, i32) {
    %c0_i32 = arith.constant 0 : i32
    %c0_i32_0 = arith.constant 0 : i32
    %c0_i32_1 = arith.constant 0 : i32
    return %c0_i32, %c0_i32_0 : i32, i32
  }
  func.func @transform_2(%arg0: i32) -> (i32, i32) {
    %c0_i32 = arith.constant 0 : i32
    %c0_i32_0 = arith.constant 0 : i32
    %c0_i32_1 = arith.constant 0 : i32
    return %c0_i32, %c0_i32_0 : i32, i32
  }
  func.func @transform_3(%arg0: i32) -> (i32, i32) {
    %c0_i32 = arith.constant 0 : i32
    %c0_i32_0 = arith.constant 0 : i32
    %c0_i32_1 = arith.constant 0 : i32
    return %c0_i32, %c0_i32_0 : i32, i32
  }
  func.func @transform_4(%arg0: i32) -> (i32, i32) {
    %c0_i32 = arith.constant 0 : i32
    %c0_i32_0 = arith.constant 0 : i32
    %c0_i32_1 = arith.constant 0 : i32
    return %c0_i32, %c0_i32_0 : i32, i32
  }
  func.func @transform_5(%arg0: i32) -> (i32, i32) {
    %c0_i32 = arith.constant 0 : i32
    %c0_i32_0 = arith.constant 0 : i32
    %c0_i32_1 = arith.constant 0 : i32
    return %c0_i32, %c0_i32_0 : i32, i32
  }
  func.func @transform_6(%arg0: i32) -> (i32, i32) {
    %c0_i32 = arith.constant 0 : i32
    %c0_i32_0 = arith.constant 0 : i32
    %c0_i32_1 = arith.constant 0 : i32
    return %c0_i32, %c0_i32_0 : i32, i32
  }
  func.func @transform_7(%arg0: i32) -> (i32, i32) {
    %c0_i32 = arith.constant 0 : i32
    %c0_i32_0 = arith.constant 0 : i32
    %c0_i32_1 = arith.constant 0 : i32
    return %c0_i32, %c0_i32_0 : i32, i32
  }
  func.func @transform_8(%arg0: i32) -> (i32, i32) {
    %c0_i32 = arith.constant 0 : i32
    %c0_i32_0 = arith.constant 0 : i32
    %c0_i32_1 = arith.constant 0 : i32
    return %c0_i32, %c0_i32_0 : i32, i32
  }
  func.func @transform_9(%arg0: i32) -> (i32, i32) {
    %c0_i32 = arith.constant 0 : i32
    %c0_i32_0 = arith.constant 0 : i32
    %c0_i32_1 = arith.constant 0 : i32
    return %c0_i32, %c0_i32_0 : i32, i32
  }
  func.func @transform_10(%arg0: i32) -> (i32, i32) {
    %c0_i32 = arith.constant 0 : i32
    %c0_i32_0 = arith.constant 0 : i32
    %c0_i32_1 = arith.constant 0 : i32
    return %c0_i32, %c0_i32_0 : i32, i32
  }
  func.func @transform_11(%arg0: i32) -> (i32, i32) {
    %c0_i32 = arith.constant 0 : i32
    %c0_i32_0 = arith.constant 0 : i32
    %c0_i32_1 = arith.constant 0 : i32
    return %c0_i32, %c0_i32_0 : i32, i32
  }
  func.func @transform_12(%arg0: i32) -> (i32, i32) {
    %c0_i32 = arith.constant 0 : i32
    %c0_i32_0 = arith.constant 0 : i32
    %c0_i32_1 = arith.constant 0 : i32
    return %c0_i32, %c0_i32_0 : i32, i32
  }
  func.func @transform_13(%arg0: i32) -> (i32, i32) {
    %c0_i32 = arith.constant 0 : i32
    %c0_i32_0 = arith.constant 0 : i32
    %c0_i32_1 = arith.constant 0 : i32
    return %c0_i32, %c0_i32_0 : i32, i32
  }
  func.func @transform_14(%arg0: i32) -> (i32, i32) {
    %c0_i32 = arith.constant 0 : i32
    %c0_i32_0 = arith.constant 0 : i32
    %c0_i32_1 = arith.constant 0 : i32
    return %c0_i32, %c0_i32_0 : i32, i32
  }
  func.func @transform_15(%arg0: i32) -> (i32, i32) {
    %c0_i32 = arith.constant 0 : i32
    %c0_i32_0 = arith.constant 0 : i32
    %c0_i32_1 = arith.constant 0 : i32
    return %c0_i32, %c0_i32_0 : i32, i32
  }
  func.func @transform_16(%arg0: i32) -> (i32, i32) {
    %c0_i32 = arith.constant 0 : i32
    %c0_i32_0 = arith.constant 0 : i32
    %c0_i32_1 = arith.constant 0 : i32
    return %c0_i32, %c0_i32_0 : i32, i32
  }
  func.func @transform_17(%arg0: i32) -> (i32, i32, i32) {
    %c0_i32 = arith.constant 0 : i32
    %c0_i32_0 = arith.constant 0 : i32
    %c0_i32_1 = arith.constant 0 : i32
    %c0_i32_2 = arith.constant 0 : i32
    return %c0_i32, %c0_i32_0, %c0_i32_1 : i32, i32, i32
  }
  func.func @transform_18(%arg0: i32) -> (i32, i32) {
    %c0_i32 = arith.constant 0 : i32
    %c0_i32_0 = arith.constant 0 : i32
    %c0_i32_1 = arith.constant 0 : i32
    return %c0_i32, %c0_i32_0 : i32, i32
  }
  func.func @transform_19(%arg0: i32) -> (i32, i32) {
    %c0_i32 = arith.constant 0 : i32
    %c0_i32_0 = arith.constant 0 : i32
    %c0_i32_1 = arith.constant 0 : i32
    return %c0_i32, %c0_i32_0 : i32, i32
  }
  func.func @transform_20(%arg0: i32) -> (i32, i32, i32) {
    %c0_i32 = arith.constant 0 : i32
    %c0_i32_0 = arith.constant 0 : i32
    %c0_i32_1 = arith.constant 0 : i32
    return %arg0, %c0_i32, %c0_i32_0 : i32, i32, i32
  }
}

</mosaic_0001>

<llo_original>
// kernel: tpu_custom_call.1
$region0: #{tpu_custom_call.1}
  #allocation0 [shape = 'u32[]', space=smem, size = 0x4, offset = 0x4, fixed_abs, tag = 'smem constant byte address 0x4 - core index']
  #allocation1 [shape = 'u32[144,128]{1,0:T(1,128)}', space=vmem, size = 0x12000, scoped, tag = 'internal scratch']
  %s0 = inlined_call_operand.hbm [shape: f32[8,16,64], index: 0, kind: input, shape index: {}]
  %s1 = inlined_call_operand.hbm [shape: bf16[64,160], index: 1, kind: input, shape index: {}]
  %s2 = inlined_call_operand.hbm [shape: f32[1,16], index: 2, kind: input, shape index: {}]
  %s3 = inlined_call_operand.hbm [shape: f32[1,16], index: 3, kind: input, shape index: {}]
  %s4 = inlined_call_operand.hbm [shape: f32[1,16], index: 4, kind: input, shape index: {}]
  %s5 = inlined_call_operand.hbm [shape: f32[1,16], index: 5, kind: input, shape index: {}]
  %s6 = inlined_call_operand.hbm [shape: f32[1,16], index: 6, kind: input, shape index: {}]
  %s7 = inlined_call_operand.hbm [shape: f32[1,16], index: 7, kind: input, shape index: {}]
  %s8 = inlined_call_operand.hbm [shape: f32[1,16], index: 8, kind: input, shape index: {}]
  %s9 = inlined_call_operand.hbm [shape: f32[1,16], index: 9, kind: input, shape index: {}]
  %s10 = inlined_call_operand.hbm [shape: f32[1,16], index: 10, kind: input, shape index: {}]
  %s11 = inlined_call_operand.hbm [shape: bf16[16,24], index: 11, kind: input, shape index: {}]
  %s12 = inlined_call_operand.hbm [shape: f32[1,24], index: 12, kind: input, shape index: {}]
  %s13 = inlined_call_operand.hbm [shape: bf16[8,16], index: 13, kind: input, shape index: {}]
  %s14 = inlined_call_operand.hbm [shape: f32[1,16], index: 14, kind: input, shape index: {}]
  %s15 = inlined_call_operand.hbm [shape: f32[1,16], index: 15, kind: input, shape index: {}]
  %s16 = inlined_call_operand.hbm [shape: f32[1,16], index: 16, kind: input, shape index: {}]
  %s17 = inlined_call_operand.vmem [shape: bf16[4,16,192], index: 17, kind: input, shape index: {}]
  %s18 = inlined_call_operand.vmem [shape: f32[1,64], index: 18, kind: input, shape index: {}]
  %s19 = inlined_call_operand.vmem [shape: f32[1,64], index: 19, kind: input, shape index: {}]
  %s20 = inlined_call_operand.hbm [shape: f32[8,16,64], index: 20, kind: output, shape index: {}]
  %s21 = sld [smem:[#allocation0]]
  $region181: #{tpu_custom_call.1} parent=0
    _
  %s23 = ssub.s32 1, %s21
  %s24 = scalar_select 0, %s23, %s21
  $region1: #{tpu_custom_call.1} parent=0
    #allocation2 [shape = 'u8[32768]{0}', space=vmem, size = 0x8000, scoped, tag = 'input window, operand 0']
    #allocation3 [shape = 's32[2]{0}', space=sflag, size = 0x8, scoped, tag = 'scoped memory for tpu_custom_call.1']
    #allocation4 [shape = 's32[2]{0}', space=sflag, size = 0x8, scoped, tag = 'scoped memory for tpu_custom_call.1']
    #allocation5 [shape = 'u8[32768]{0}', space=vmem, size = 0x8000, scoped, tag = 'input window, operand 1, single buffered']
    #allocation6 [shape = 's32[1]{0}', space=sflag, size = 0x4, scoped, tag = 'scoped memory for tpu_custom_call.1']
    #allocation7 [shape = 'u8[512]{0}', space=vmem, size = 0x400, scoped, tag = 'input window, operand 2, single buffered']
    #allocation8 [shape = 'u8[512]{0}', space=vmem, size = 0x400, scoped, tag = 'input window, operand 3, single buffered']
    #allocation9 [shape = 's32[1]{0}', space=sflag, size = 0x4, scoped, tag = 'scoped memory for tpu_custom_call.1']
    #allocation10 [shape = 'u8[512]{0}', space=vmem, size = 0x400, scoped, tag = 'input window, operand 4, single buffered']
    #allocation11 [shape = 'u8[512]{0}', space=vmem, size = 0x400, scoped, tag = 'input window, operand 5, single buffered']
    #allocation12 [shape = 's32[1]{0}', space=sflag, size = 0x4, scoped, tag = 'scoped memory for tpu_custom_call.1']
    #allocation13 [shape = 'u8[512]{0}', space=vmem, size = 0x400, scoped, tag = 'input window, operand 6, single buffered']
    #allocation14 [shape = 'u8[512]{0}', space=vmem, size = 0x400, scoped, tag = 'input window, operand 7, single buffered']
    #allocation15 [shape = 's32[1]{0}', space=sflag, size = 0x4, scoped, tag = 'scoped memory for tpu_custom_call.1']
    #allocation16 [shape = 'u8[512]{0}', space=vmem, size = 0x400, scoped, tag = 'input window, operand 8, single buffered']
    #allocation17 [shape = 'u8[512]{0}', space=vmem, size = 0x400, scoped, tag = 'input window, operand 9, single buffered']
    #allocation18 [shape = 's32[1]{0}', space=sflag, size = 0x4, scoped, tag = 'scoped memory for tpu_custom_call.1']
    #allocation19 [shape = 'u8[512]{0}', space=vmem, size = 0x400, scoped, tag = 'input window, operand 10, single buffered']
    #allocation20 [shape = 'u8[4096]{0}', space=vmem, size = 0x1000, scoped, tag = 'input window, operand 11, single buffered']
    #allocation21 [shape = 's32[1]{0}', space=sflag, size = 0x4, scoped, tag = 'scoped memory for tpu_custom_call.1']
    #allocation22 [shape = 'u8[512]{0}', space=vmem, size = 0x400, scoped, tag = 'input window, operand 12, single buffered']
    #allocation23 [shape = 'u8[2048]{0}', space=vmem, size = 0x800, scoped, tag = 'input window, operand 13, single buffered']
    #allocation24 [shape = 's32[1]{0}', space=sflag, size = 0x4, scoped, tag = 'scoped memory for tpu_custom_call.1']
    #allocation25 [shape = 'u8[512]{0}', space=vmem, size = 0x400, scoped, tag = 'input window, operand 14, single buffered']
    #allocation26 [shape = 'u8[512]{0}', space=vmem, size = 0x400, scoped, tag = 'input window, operand 15, single buffered']
    #allocation27 [shape = 's32[1]{0}', space=sflag, size = 0x4, scoped, tag = 'scoped memory for tpu_custom_call.1']
    #allocation28 [shape = 'u8[512]{0}', space=vmem, size = 0x400, scoped, tag = 'input window, operand 16, single buffered']
    #allocation29 [shape = 'u8[32768]{0}', space=vmem, size = 0x8000, scoped, tag = 'output window, operand 0']
    %25 = vsyncpa [#allocation3], 0
    %s26 = scalar_lea.sflag [#allocation3], 1
    %27 = vsyncpa %s26, 0
    %28 = vsyncpa [#allocation6], 0
    %29 = vsyncpa [#allocation9], 0
    %30 = vsyncpa [#allocation12], 0
    %31 = vsyncpa [#allocation15], 0
    %32 = vsyncpa [#allocation18], 0
    %33 = vsyncpa [#allocation21], 0
    %34 = vsyncpa [#allocation24], 0
    %35 = vsyncpa [#allocation27], 0
    %36 = vsyncpa [#allocation4], 0
    %s37 = scalar_lea.sflag [#allocation4], 1
    %38 = vsyncpa %s37, 0
    loop: start=0, step=1, limit=6
    $region2: #{tpu_custom_call.1} parent=1 // loop_pre_header
      _
    $region3: #{tpu_custom_call.1} parent=1 // loop_header
      %s40 = sphi 0, %s44
      %p41 = scmp.ge.s32.totalorder %s40, 6
      %s50 = sphi 0, %s52
      %s53 = sphi 0, %s50
      %s54 = sphi 0, %s53
      %s70 = sphi 0, %s54
      %s74 = sphi 0, %s74
      %s76 = sphi 0, %s74
      %s77 = sphi 0, %s76
      %s91 = sphi 0, %s77
      %s95 = sphi 0, %s95
      %s97 = sphi 0, %s95
      %s98 = sphi 0, %s97
      %s112 = sphi 0, %s98
      %s116 = sphi 0, %s116
      %s118 = sphi 0, %s116
      %s119 = sphi 0, %s118
      %s133 = sphi 0, %s119
      %s137 = sphi 0, %s137
      %s139 = sphi 0, %s137
      %s140 = sphi 0, %s139
      %s154 = sphi 0, %s140
      %s158 = sphi 0, %s158
      %s160 = sphi 0, %s158
      %s161 = sphi 0, %s160
      %s175 = sphi 0, %s161
      %s179 = sphi 0, %s179
      %s181 = sphi 0, %s179
      %s182 = sphi 0, %s181
      %s196 = sphi 0, %s182
      %s200 = sphi 0, %s200
      %s202 = sphi 0, %s200
      %s203 = sphi 0, %s202
      %s217 = sphi 0, %s203
      %s221 = sphi 0, %s221
      %s223 = sphi 0, %s221
      %s224 = sphi 0, %s223
      %s238 = sphi 0, %s224
      %s242 = sphi 0, %s242
      %s244 = sphi 0, %s242
      %s245 = sphi 0, %s244
      %s259 = sphi 0, %s245
      %s263 = sphi 0, %s263
      %s265 = sphi 0, %s263
      %s266 = sphi 0, %s265
      %s280 = sphi 0, %s266
      %s284 = sphi 0, %s284
      %s286 = sphi 0, %s284
      %s287 = sphi 0, %s286
      %s301 = sphi 0, %s287
      %s305 = sphi 0, %s305
      %s307 = sphi 0, %s305
      %s308 = sphi 0, %s307
      %s322 = sphi 0, %s308
      %s326 = sphi 0, %s326
      %s328 = sphi 0, %s326
      %s329 = sphi 0, %s328
      %s343 = sphi 0, %s329
      %s347 = sphi 0, %s347
      %s349 = sphi 0, %s347
      %s350 = sphi 0, %s349
      %s364 = sphi 0, %s350
      %s368 = sphi 0, %s368
      %s370 = sphi 0, %s368
      %s371 = sphi 0, %s370
      %s385 = sphi 0, %s371
      %s389 = sphi 0, %s389
      %s391 = sphi 0, %s389
      %s392 = sphi 0, %s391
      %s406 = sphi 0, %s392
      %s410 = sphi 0, %s410
      %s412 = sphi 0, %s410
      %s413 = sphi 0, %s412
      %s427 = sphi 0, %s413
      %s431 = sphi 0, %s431
      %s433 = sphi 0, %s431
      %s434 = sphi 0, %s433
      %s448 = sphi 0, %s434
      %s452 = sphi 0, %s452
      %s454 = sphi 0, %s452
      %s455 = sphi 0, %s454
      %s469 = sphi 0, %s455
      %s475 = sphi 0, %s477
      %s478 = sphi 0, %s475
      %s479 = sphi 0, %s478
      %s495 = sphi 0, %s479
    $region4: #{tpu_custom_call.1} parent=1 // loop_header_branch
      %43 = sbr.rel (%p41) target = $region8
    $region5: #{tpu_custom_call.1} parent=1 // loop_body
      %s45 = ssub.s32 %s40, 1
      %s46 = ssub.s32 %s40, 2
      %s47 = sadd.s32 %s40, 1
      %s48 = ssub.s32 %s40, %s47
      %p49 = scmp.eq.s32.totalorder %s48, 0
      %s51 = sadd.s32 %s50, 1
      %s52 = scalar_select %p49, %s50, %s51
      %p55 = pneg %p49
      %p56 = scmp.eq.s32.totalorder %s40, 3
      %p57 = por %p55, %p56
      %p58 = scmp.ne.s32.totalorder %s50, %s53
      %p59 = scmp.eq.s32.totalorder %s40, 0
      %p60 = por %p58, %p59
      %p61 = scmp.ne.s32.totalorder %s50, %s53
      %p62 = scmp.eq.s32.totalorder %s45, 3
      %p63 = por %p61, %p62
      %p64 = scmp.ne.s32.totalorder %s53, %s54
      %p65 = scmp.eq.s32.totalorder %s45, 0
      %p66 = por %p64, %p65
      %p67 = scmp.ne.s32.totalorder %s53, %s54
      %p68 = scmp.eq.s32.totalorder %s46, 3
      %p69 = por %p67, %p68
      %p71 = scmp.ne.s32.totalorder %s54, %s70
      %p72 = scmp.eq.s32.totalorder %s46, 0
      %p73 = por %p71, %p72
      %s75 = sadd.s32 %s74, 1
      %p78 = scmp.eq.s32.totalorder %s40, 3
      %p79 = scmp.ne.s32.totalorder %s74, %s76
      %p80 = scmp.eq.s32.totalorder %s40, 0
      %p81 = por %p79, %p80
      %p82 = scmp.ne.s32.totalorder %s74, %s76
      %p83 = scmp.eq.s32.totalorder %s45, 3
      %p84 = por %p82, %p83
      %p85 = scmp.ne.s32.totalorder %s76, %s77
      %p86 = scmp.eq.s32.totalorder %s45, 0
      %p87 = por %p85, %p86
      %p88 = scmp.ne.s32.totalorder %s76, %s77
      %p89 = scmp.eq.s32.totalorder %s46, 3
      %p90 = por %p88, %p89
      %p92 = scmp.ne.s32.totalorder %s77, %s91
      %p93 = scmp.eq.s32.totalorder %s46, 0
      %p94 = por %p92, %p93
      %s96 = sadd.s32 %s95, 1
      %p99 = scmp.eq.s32.totalorder %s40, 3
      %p100 = scmp.ne.s32.totalorder %s95, %s97
      %p101 = scmp.eq.s32.totalorder %s40, 0
      %p102 = por %p100, %p101
      %p103 = scmp.ne.s32.totalorder %s95, %s97
      %p104 = scmp.eq.s32.totalorder %s45, 3
      %p105 = por %p103, %p104
      %p106 = scmp.ne.s32.totalorder %s97, %s98
      %p107 = scmp.eq.s32.totalorder %s45, 0
      %p108 = por %p106, %p107
      %p109 = scmp.ne.s32.totalorder %s97, %s98
      %p110 = scmp.eq.s32.totalorder %s46, 3
      %p111 = por %p109, %p110
      %p113 = scmp.ne.s32.totalorder %s98, %s112
      %p114 = scmp.eq.s32.totalorder %s46, 0
      %p115 = por %p113, %p114
      %s117 = sadd.s32 %s116, 1
      %p120 = scmp.eq.s32.totalorder %s40, 3
      %p121 = scmp.ne.s32.totalorder %s116, %s118
      %p122 = scmp.eq.s32.totalorder %s40, 0
      %p123 = por %p121, %p122
      %p124 = scmp.ne.s32.totalorder %s116, %s118
      %p125 = scmp.eq.s32.totalorder %s45, 3
      %p126 = por %p124, %p125
      %p127 = scmp.ne.s32.totalorder %s118, %s119
      %p128 = scmp.eq.s32.totalorder %s45, 0
      %p129 = por %p127, %p128
      %p130 = scmp.ne.s32.totalorder %s118, %s119
      %p131 = scmp.eq.s32.totalorder %s46, 3
      %p132 = por %p130, %p131
      %p134 = scmp.ne.s32.totalorder %s119, %s133
      %p135 = scmp.eq.s32.totalorder %s46, 0
      %p136 = por %p134, %p135
      %s138 = sadd.s32 %s137, 1
      %p141 = scmp.eq.s32.totalorder %s40, 3
      %p142 = scmp.ne.s32.totalorder %s137, %s139
      %p143 = scmp.eq.s32.totalorder %s40, 0
      %p144 = por %p142, %p143
      %p145 = scmp.ne.s32.totalorder %s137, %s139
      %p146 = scmp.eq.s32.totalorder %s45, 3
      %p147 = por %p145, %p146
      %p148 = scmp.ne.s32.totalorder %s139, %s140
      %p149 = scmp.eq.s32.totalorder %s45, 0
      %p150 = por %p148, %p149
      %p151 = scmp.ne.s32.totalorder %s139, %s140
      %p152 = scmp.eq.s32.totalorder %s46, 3
      %p153 = por %p151, %p152
      %p155 = scmp.ne.s32.totalorder %s140, %s154
      %p156 = scmp.eq.s32.totalorder %s46, 0
      %p157 = por %p155, %p156
      %s159 = sadd.s32 %s158, 1
      %p162 = scmp.eq.s32.totalorder %s40, 3
      %p163 = scmp.ne.s32.totalorder %s158, %s160
      %p164 = scmp.eq.s32.totalorder %s40, 0
      %p165 = por %p163, %p164
      %p166 = scmp.ne.s32.totalorder %s158, %s160
      %p167 = scmp.eq.s32.totalorder %s45, 3
      %p168 = por %p166, %p167
      %p169 = scmp.ne.s32.totalorder %s160, %s161
      %p170 = scmp.eq.s32.totalorder %s45, 0
      %p171 = por %p169, %p170
      %p172 = scmp.ne.s32.totalorder %s160, %s161
      %p173 = scmp.eq.s32.totalorder %s46, 3
      %p174 = por %p172, %p173
      %p176 = scmp.ne.s32.totalorder %s161, %s175
      %p177 = scmp.eq.s32.totalorder %s46, 0
      %p178 = por %p176, %p177
      %s180 = sadd.s32 %s179, 1
      %p183 = scmp.eq.s32.totalorder %s40, 3
      %p184 = scmp.ne.s32.totalorder %s179, %s181
      %p185 = scmp.eq.s32.totalorder %s40, 0
      %p186 = por %p184, %p185
      %p187 = scmp.ne.s32.totalorder %s179, %s181
      %p188 = scmp.eq.s32.totalorder %s45, 3
      %p189 = por %p187, %p188
      %p190 = scmp.ne.s32.totalorder %s181, %s182
      %p191 = scmp.eq.s32.totalorder %s45, 0
      %p192 = por %p190, %p191
      %p193 = scmp.ne.s32.totalorder %s181, %s182
      %p194 = scmp.eq.s32.totalorder %s46, 3
      %p195 = por %p193, %p194
      %p197 = scmp.ne.s32.totalorder %s182, %s196
      %p198 = scmp.eq.s32.totalorder %s46, 0
      %p199 = por %p197, %p198
      %s201 = sadd.s32 %s200, 1
      %p204 = scmp.eq.s32.totalorder %s40, 3
      %p205 = scmp.ne.s32.totalorder %s200, %s202
      %p206 = scmp.eq.s32.totalorder %s40, 0
      %p207 = por %p205, %p206
      %p208 = scmp.ne.s32.totalorder %s200, %s202
      %p209 = scmp.eq.s32.totalorder %s45, 3
      %p210 = por %p208, %p209
      %p211 = scmp.ne.s32.totalorder %s202, %s203
      %p212 = scmp.eq.s32.totalorder %s45, 0
      %p213 = por %p211, %p212
      %p214 = scmp.ne.s32.totalorder %s202, %s203
      %p215 = scmp.eq.s32.totalorder %s46, 3
      %p216 = por %p214, %p215
      %p218 = scmp.ne.s32.totalorder %s203, %s217
      %p219 = scmp.eq.s32.totalorder %s46, 0
      %p220 = por %p218, %p219
      %s222 = sadd.s32 %s221, 1
      %p225 = scmp.eq.s32.totalorder %s40, 3
      %p226 = scmp.ne.s32.totalorder %s221, %s223
      %p227 = scmp.eq.s32.totalorder %s40, 0
      %p228 = por %p226, %p227
      %p229 = scmp.ne.s32.totalorder %s221, %s223
      %p230 = scmp.eq.s32.totalorder %s45, 3
      %p231 = por %p229, %p230
      %p232 = scmp.ne.s32.totalorder %s223, %s224
      %p233 = scmp.eq.s32.totalorder %s45, 0
      %p234 = por %p232, %p233
      %p235 = scmp.ne.s32.totalorder %s223, %s224
      %p236 = scmp.eq.s32.totalorder %s46, 3
      %p237 = por %p235, %p236
      %p239 = scmp.ne.s32.totalorder %s224, %s238
      %p240 = scmp.eq.s32.totalorder %s46, 0
      %p241 = por %p239, %p240
      %s243 = sadd.s32 %s242, 1
      %p246 = scmp.eq.s32.totalorder %s40, 3
      %p247 = scmp.ne.s32.totalorder %s242, %s244
      %p248 = scmp.eq.s32.totalorder %s40, 0
      %p249 = por %p247, %p248
      %p250 = scmp.ne.s32.totalorder %s242, %s244
      %p251 = scmp.eq.s32.totalorder %s45, 3
      %p252 = por %p250, %p251
      %p253 = scmp.ne.s32.totalorder %s244, %s245
      %p254 = scmp.eq.s32.totalorder %s45, 0
      %p255 = por %p253, %p254
      %p256 = scmp.ne.s32.totalorder %s244, %s245
      %p257 = scmp.eq.s32.totalorder %s46, 3
      %p258 = por %p256, %p257
      %p260 = scmp.ne.s32.totalorder %s245, %s259
      %p261 = scmp.eq.s32.totalorder %s46, 0
      %p262 = por %p260, %p261
      %s264 = sadd.s32 %s263, 1
      %p267 = scmp.eq.s32.totalorder %s40, 3
      %p268 = scmp.ne.s32.totalorder %s263, %s265
      %p269 = scmp.eq.s32.totalorder %s40, 0
      %p270 = por %p268, %p269
      %p271 = scmp.ne.s32.totalorder %s263, %s265
      %p272 = scmp.eq.s32.totalorder %s45, 3
      %p273 = por %p271, %p272
      %p274 = scmp.ne.s32.totalorder %s265, %s266
      %p275 = scmp.eq.s32.totalorder %s45, 0
      %p276 = por %p274, %p275
      %p277 = scmp.ne.s32.totalorder %s265, %s266
      %p278 = scmp.eq.s32.totalorder %s46, 3
      %p279 = por %p277, %p278
      %p281 = scmp.ne.s32.totalorder %s266, %s280
      %p282 = scmp.eq.s32.totalorder %s46, 0
      %p283 = por %p281, %p282
      %s285 = sadd.s32 %s284, 1
      %p288 = scmp.eq.s32.totalorder %s40, 3
      %p289 = scmp.ne.s32.totalorder %s284, %s286
      %p290 = scmp.eq.s32.totalorder %s40, 0
      %p291 = por %p289, %p290
      %p292 = scmp.ne.s32.totalorder %s284, %s286
      %p293 = scmp.eq.s32.totalorder %s45, 3
      %p294 = por %p292, %p293
      %p295 = scmp.ne.s32.totalorder %s286, %s287
      %p296 = scmp.eq.s32.totalorder %s45, 0
      %p297 = por %p295, %p296
      %p298 = scmp.ne.s32.totalorder %s286, %s287
      %p299 = scmp.eq.s32.totalorder %s46, 3
      %p300 = por %p298, %p299
      %p302 = scmp.ne.s32.totalorder %s287, %s301
      %p303 = scmp.eq.s32.totalorder %s46, 0
      %p304 = por %p302, %p303
      %s306 = sadd.s32 %s305, 1
      %p309 = scmp.eq.s32.totalorder %s40, 3
      %p310 = scmp.ne.s32.totalorder %s305, %s307
      %p311 = scmp.eq.s32.totalorder %s40, 0
      %p312 = por %p310, %p311
      %p313 = scmp.ne.s32.totalorder %s305, %s307
      %p314 = scmp.eq.s32.totalorder %s45, 3
      %p315 = por %p313, %p314
      %p316 = scmp.ne.s32.totalorder %s307, %s308
      %p317 = scmp.eq.s32.totalorder %s45, 0
      %p318 = por %p316, %p317
      %p319 = scmp.ne.s32.totalorder %s307, %s308
      %p320 = scmp.eq.s32.totalorder %s46, 3
      %p321 = por %p319, %p320
      %p323 = scmp.ne.s32.totalorder %s308, %s322
      %p324 = scmp.eq.s32.totalorder %s46, 0
      %p325 = por %p323, %p324
      %s327 = sadd.s32 %s326, 1
      %p330 = scmp.eq.s32.totalorder %s40, 3
      %p331 = scmp.ne.s32.totalorder %s326, %s328
      %p332 = scmp.eq.s32.totalorder %s40, 0
      %p333 = por %p331, %p332
      %p334 = scmp.ne.s32.totalorder %s326, %s328
      %p335 = scmp.eq.s32.totalorder %s45, 3
      %p336 = por %p334, %p335
      %p337 = scmp.ne.s32.totalorder %s328, %s329
      %p338 = scmp.eq.s32.totalorder %s45, 0
      %p339 = por %p337, %p338
      %p340 = scmp.ne.s32.totalorder %s328, %s329
      %p341 = scmp.eq.s32.totalorder %s46, 3
      %p342 = por %p340, %p341
      %p344 = scmp.ne.s32.totalorder %s329, %s343
      %p345 = scmp.eq.s32.totalorder %s46, 0
      %p346 = por %p344, %p345
      %s348 = sadd.s32 %s347, 1
      %p351 = scmp.eq.s32.totalorder %s40, 3
      %p352 = scmp.ne.s32.totalorder %s347, %s349
      %p353 = scmp.eq.s32.totalorder %s40, 0
      %p354 = por %p352, %p353
      %p355 = scmp.ne.s32.totalorder %s347, %s349
      %p356 = scmp.eq.s32.totalorder %s45, 3
      %p357 = por %p355, %p356
      %p358 = scmp.ne.s32.totalorder %s349, %s350
      %p359 = scmp.eq.s32.totalorder %s45, 0
      %p360 = por %p358, %p359
      %p361 = scmp.ne.s32.totalorder %s349, %s350
      %p362 = scmp.eq.s32.totalorder %s46, 3
      %p363 = por %p361, %p362
      %p365 = scmp.ne.s32.totalorder %s350, %s364
      %p366 = scmp.eq.s32.totalorder %s46, 0
      %p367 = por %p365, %p366
      %s369 = sadd.s32 %s368, 1
      %p372 = scmp.eq.s32.totalorder %s40, 3
      %p373 = scmp.ne.s32.totalorder %s368, %s370
      %p374 = scmp.eq.s32.totalorder %s40, 0
      %p375 = por %p373, %p374
      %p376 = scmp.ne.s32.totalorder %s368, %s370
      %p377 = scmp.eq.s32.totalorder %s45, 3
      %p378 = por %p376, %p377
      %p379 = scmp.ne.s32.totalorder %s370, %s371
      %p380 = scmp.eq.s32.totalorder %s45, 0
      %p381 = por %p379, %p380
      %p382 = scmp.ne.s32.totalorder %s370, %s371
      %p383 = scmp.eq.s32.totalorder %s46, 3
      %p384 = por %p382, %p383
      %p386 = scmp.ne.s32.totalorder %s371, %s385
      %p387 = scmp.eq.s32.totalorder %s46, 0
      %p388 = por %p386, %p387
      %s390 = sadd.s32 %s389, 1
      %p393 = scmp.eq.s32.totalorder %s40, 3
      %p394 = scmp.ne.s32.totalorder %s389, %s391
      %p395 = scmp.eq.s32.totalorder %s40, 0
      %p396 = por %p394, %p395
      %p397 = scmp.ne.s32.totalorder %s389, %s391
      %p398 = scmp.eq.s32.totalorder %s45, 3
      %p399 = por %p397, %p398
      %p400 = scmp.ne.s32.totalorder %s391, %s392
      %p401 = scmp.eq.s32.totalorder %s45, 0
      %p402 = por %p400, %p401
      %p403 = scmp.ne.s32.totalorder %s391, %s392
      %p404 = scmp.eq.s32.totalorder %s46, 3
      %p405 = por %p403, %p404
      %p407 = scmp.ne.s32.totalorder %s392, %s406
      %p408 = scmp.eq.s32.totalorder %s46, 0
      %p409 = por %p407, %p408
      %s411 = sadd.s32 %s410, 1
      %p414 = scmp.eq.s32.totalorder %s40, 3
      %p415 = scmp.ne.s32.totalorder %s410, %s412
      %p416 = scmp.eq.s32.totalorder %s40, 0
      %p417 = por %p415, %p416
      %p418 = scmp.ne.s32.totalorder %s410, %s412
      %p419 = scmp.eq.s32.totalorder %s45, 3
      %p420 = por %p418, %p419
      %p421 = scmp.ne.s32.totalorder %s412, %s413
      %p422 = scmp.eq.s32.totalorder %s45, 0
      %p423 = por %p421, %p422
      %p424 = scmp.ne.s32.totalorder %s412, %s413
      %p425 = scmp.eq.s32.totalorder %s46, 3
      %p426 = por %p424, %p425
      %p428 = scmp.ne.s32.totalorder %s413, %s427
      %p429 = scmp.eq.s32.totalorder %s46, 0
      %p430 = por %p428, %p429
      %s432 = sadd.s32 %s431, 1
      %p435 = scmp.eq.s32.totalorder %s40, 3
      %p436 = scmp.ne.s32.totalorder %s431, %s433
      %p437 = scmp.eq.s32.totalorder %s40, 0
      %p438 = por %p436, %p437
      %p439 = scmp.ne.s32.totalorder %s431, %s433
      %p440 = scmp.eq.s32.totalorder %s45, 3
      %p441 = por %p439, %p440
      %p442 = scmp.ne.s32.totalorder %s433, %s434
      %p443 = scmp.eq.s32.totalorder %s45, 0
      %p444 = por %p442, %p443
      %p445 = scmp.ne.s32.totalorder %s433, %s434
      %p446 = scmp.eq.s32.totalorder %s46, 3
      %p447 = por %p445, %p446
      %p449 = scmp.ne.s32.totalorder %s434, %s448
      %p450 = scmp.eq.s32.totalorder %s46, 0
      %p451 = por %p449, %p450
      %s453 = sadd.s32 %s452, 1
      %p456 = scmp.eq.s32.totalorder %s40, 3
      %p457 = scmp.ne.s32.totalorder %s452, %s454
      %p458 = scmp.eq.s32.totalorder %s40, 0
      %p459 = por %p457, %p458
      %p460 = scmp.ne.s32.totalorder %s452, %s454
      %p461 = scmp.eq.s32.totalorder %s45, 3
      %p462 = por %p460, %p461
      %p463 = scmp.ne.s32.totalorder %s454, %s455
      %p464 = scmp.eq.s32.totalorder %s45, 0
      %p465 = por %p463, %p464
      %p466 = scmp.ne.s32.totalorder %s454, %s455
      %p467 = scmp.eq.s32.totalorder %s46, 3
      %p468 = por %p466, %p467
      %p470 = scmp.ne.s32.totalorder %s455, %s469
      %p471 = scmp.eq.s32.totalorder %s46, 0
      %p472 = por %p470, %p471
      %s473 = ssub.s32 %s40, %s47
      %p474 = scmp.eq.s32.totalorder %s473, 0
      %s476 = sadd.s32 %s475, 1
      %s477 = scalar_select %p474, %s475, %s476
      %p480 = pneg %p474
      %p481 = scmp.eq.s32.totalorder %s40, 3
      %p482 = por %p480, %p481
      %p483 = scmp.ne.s32.totalorder %s475, %s478
      %p484 = scmp.eq.s32.totalorder %s40, 0
      %p485 = por %p483, %p484
      %p486 = scmp.ne.s32.totalorder %s475, %s478
      %p487 = scmp.eq.s32.totalorder %s45, 3
      %p488 = por %p486, %p487
      %p489 = scmp.ne.s32.totalorder %s478, %s479
      %p490 = scmp.eq.s32.totalorder %s45, 0
      %p491 = por %p489, %p490
      %p492 = scmp.ne.s32.totalorder %s478, %s479
      %p493 = scmp.eq.s32.totalorder %s46, 3
      %p494 = por %p492, %p493
      %p496 = scmp.ne.s32.totalorder %s479, %s495
      %p497 = scmp.eq.s32.totalorder %s46, 0
      %p498 = por %p496, %p497
      %p499 = scmp.le.s32.totalorder 1, %s40
      %p500 = scmp.lt.s32.totalorder %s40, 5
      %p501 = pnand %p499, %p500
      %p502 = pneg %p501
      // Predicated region
      $region9: #{tpu_custom_call.1} parent=5 // pred_check
        _
      $region10: #{tpu_custom_call.1} parent=5 // pred_check_branch
        %504 = sbr.rel (%p501) target = $region12
      $region11: #{tpu_custom_call.1} parent=5 // pred_region
        %s505 = ssub.s32 %s40, 1
        // Predicated region
        $region13: #{tpu_custom_call.1} parent=11 // pred_check
          %p506 = pneg %p87
        $region14: #{tpu_custom_call.1} parent=11 // pred_check_branch
          %508 = sbr.rel (%p506) target = $region16
        $region15: #{tpu_custom_call.1} parent=11 // pred_region
          %s510 = ssub.s32 1024, 1024
          %511 = vsyncadd [#allocation6], %s510
          %s512 = sshll.u32 [#allocation5], 4
          %s513 = int_to_ptr.vmem [resolvable:$true] %s512
          %518 = dma.hbm_to_vmem [thread:$0]  %s1, 1024, %s513, [#allocation6], 128, 128, 8
        $region16: #{tpu_custom_call.1} parent=11 // pred_fallthru
          _
        // Predicated region
        $region17: #{tpu_custom_call.1} parent=11 // pred_check
          %p519 = pneg %p108
        $region18: #{tpu_custom_call.1} parent=11 // pred_check_branch
          %521 = sbr.rel (%p519) target = $region20
        $region19: #{tpu_custom_call.1} parent=11 // pred_region
          %s523 = ssub.s32 16, 16
          %524 = vsyncadd [#allocation6], %s523
          %s526 = sshll.u32 [#allocation7], 4
          %s527 = int_to_ptr.vmem [resolvable:$true] %s526
          %529 = dma.hbm_to_vmem [thread:$0]  %s2, 16, %s527, [#allocation6]
        $region20: #{tpu_custom_call.1} parent=11 // pred_fallthru
          _
        // Predicated region
        $region21: #{tpu_custom_call.1} parent=11 // pred_check
          %p530 = pneg %p129
        $region22: #{tpu_custom_call.1} parent=11 // pred_check_branch
          %532 = sbr.rel (%p530) target = $region24
        $region23: #{tpu_custom_call.1} parent=11 // pred_region
          %s534 = ssub.s32 16, 16
          %535 = vsyncadd [#allocation9], %s534
          %s537 = sshll.u32 [#allocation8], 4
          %s538 = int_to_ptr.vmem [resolvable:$true] %s537
          %540 = dma.hbm_to_vmem [thread:$0]  %s3, 16, %s538, [#allocation9]
        $region24: #{tpu_custom_call.1} parent=11 // pred_fallthru
          _
        // Predicated region
        $region25: #{tpu_custom_call.1} parent=11 // pred_check
          %p541 = pneg %p150
        $region26: #{tpu_custom_call.1} parent=11 // pred_check_branch
          %543 = sbr.rel (%p541) target = $region28
        $region27: #{tpu_custom_call.1} parent=11 // pred_region
          %s545 = ssub.s32 16, 16
          %546 = vsyncadd [#allocation9], %s545
          %s548 = sshll.u32 [#allocation10], 4
          %s549 = int_to_ptr.vmem [resolvable:$true] %s548
          %551 = dma.hbm_to_vmem [thread:$0]  %s4, 16, %s549, [#allocation9]
        $region28: #{tpu_custom_call.1} parent=11 // pred_fallthru
          _
        // Predicated region
        $region29: #{tpu_custom_call.1} parent=11 // pred_check
          %p552 = pneg %p171
        $region30: #{tpu_custom_call.1} parent=11 // pred_check_branch
          %554 = sbr.rel (%p552) target = $region32
        $region31: #{tpu_custom_call.1} parent=11 // pred_region
          %s556 = ssub.s32 16, 16
          %557 = vsyncadd [#allocation12], %s556
          %s559 = sshll.u32 [#allocation11], 4
          %s560 = int_to_ptr.vmem [resolvable:$true] %s559
          %562 = dma.hbm_to_vmem [thread:$0]  %s5, 16, %s560, [#allocation12]
        $region32: #{tpu_custom_call.1} parent=11 // pred_fallthru
          _
        // Predicated region
        $region33: #{tpu_custom_call.1} parent=11 // pred_check
          %p563 = pneg %p192
        $region34: #{tpu_custom_call.1} parent=11 // pred_check_branch
          %565 = sbr.rel (%p563) target = $region36
        $region35: #{tpu_custom_call.1} parent=11 // pred_region
          %s567 = ssub.s32 16, 16
          %568 = vsyncadd [#allocation12], %s567
          %s570 = sshll.u32 [#allocation13], 4
          %s571 = int_to_ptr.vmem [resolvable:$true] %s570
          %573 = dma.hbm_to_vmem [thread:$0]  %s6, 16, %s571, [#allocation12]
        $region36: #{tpu_custom_call.1} parent=11 // pred_fallthru
          _
        // Predicated region
        $region37: #{tpu_custom_call.1} parent=11 // pred_check
          %p574 = pneg %p213
        $region38: #{tpu_custom_call.1} parent=11 // pred_check_branch
          %576 = sbr.rel (%p574) target = $region40
        $region39: #{tpu_custom_call.1} parent=11 // pred_region
          %s578 = ssub.s32 16, 16
          %579 = vsyncadd [#allocation15], %s578
          %s581 = sshll.u32 [#allocation14], 4
          %s582 = int_to_ptr.vmem [resolvable:$true] %s581
          %584 = dma.hbm_to_vmem [thread:$0]  %s7, 16, %s582, [#allocation15]
        $region40: #{tpu_custom_call.1} parent=11 // pred_fallthru
          _
        // Predicated region
        $region41: #{tpu_custom_call.1} parent=11 // pred_check
          %p585 = pneg %p234
        $region42: #{tpu_custom_call.1} parent=11 // pred_check_branch
          %587 = sbr.rel (%p585) target = $region44
        $region43: #{tpu_custom_call.1} parent=11 // pred_region
          %s589 = ssub.s32 16, 16
          %590 = vsyncadd [#allocation15], %s589
          %s592 = sshll.u32 [#allocation16], 4
          %s593 = int_to_ptr.vmem [resolvable:$true] %s592
          %595 = dma.hbm_to_vmem [thread:$0]  %s8, 16, %s593, [#allocation15]
        $region44: #{tpu_custom_call.1} parent=11 // pred_fallthru
          _
        // Predicated region
        $region45: #{tpu_custom_call.1} parent=11 // pred_check
          %p596 = pneg %p255
        $region46: #{tpu_custom_call.1} parent=11 // pred_check_branch
          %598 = sbr.rel (%p596) target = $region48
        $region47: #{tpu_custom_call.1} parent=11 // pred_region
          %s600 = ssub.s32 16, 16
          %601 = vsyncadd [#allocation18], %s600
          %s603 = sshll.u32 [#allocation17], 4
          %s604 = int_to_ptr.vmem [resolvable:$true] %s603
          %606 = dma.hbm_to_vmem [thread:$0]  %s9, 16, %s604, [#allocation18]
        $region48: #{tpu_custom_call.1} parent=11 // pred_fallthru
          _
        // Predicated region
        $region49: #{tpu_custom_call.1} parent=11 // pred_check
          %p607 = pneg %p276
        $region50: #{tpu_custom_call.1} parent=11 // pred_check_branch
          %609 = sbr.rel (%p607) target = $region52
        $region51: #{tpu_custom_call.1} parent=11 // pred_region
          %s611 = ssub.s32 16, 16
          %612 = vsyncadd [#allocation18], %s611
          %s614 = sshll.u32 [#allocation19], 4
          %s615 = int_to_ptr.vmem [resolvable:$true] %s614
          %617 = dma.hbm_to_vmem [thread:$0]  %s10, 16, %s615, [#allocation18]
        $region52: #{tpu_custom_call.1} parent=11 // pred_fallthru
          _
        // Predicated region
        $region53: #{tpu_custom_call.1} parent=11 // pred_check
          %p618 = pneg %p297
        $region54: #{tpu_custom_call.1} parent=11 // pred_check_branch
          %620 = sbr.rel (%p618) target = $region56
        $region55: #{tpu_custom_call.1} parent=11 // pred_region
          %s622 = ssub.s32 128, 128
          %623 = vsyncadd [#allocation21], %s622
          %s624 = sshll.u32 [#allocation20], 4
          %s625 = int_to_ptr.vmem [resolvable:$true] %s624
          %630 = dma.hbm_to_vmem [thread:$0]  %s11, 128, %s625, [#allocation21], 64, 64, 4
        $region56: #{tpu_custom_call.1} parent=11 // pred_fallthru
          _
        // Predicated region
        $region57: #{tpu_custom_call.1} parent=11 // pred_check
          %p631 = pneg %p318
        $region58: #{tpu_custom_call.1} parent=11 // pred_check_branch
          %633 = sbr.rel (%p631) target = $region60
        $region59: #{tpu_custom_call.1} parent=11 // pred_region
          %s635 = ssub.s32 16, 16
          %636 = vsyncadd [#allocation21], %s635
          %s638 = sshll.u32 [#allocation22], 4
          %s639 = int_to_ptr.vmem [resolvable:$true] %s638
          %641 = dma.hbm_to_vmem [thread:$0]  %s12, 16, %s639, [#allocation21]
        $region60: #{tpu_custom_call.1} parent=11 // pred_fallthru
          _
        // Predicated region
        $region61: #{tpu_custom_call.1} parent=11 // pred_check
          %p642 = pneg %p339
        $region62: #{tpu_custom_call.1} parent=11 // pred_check_branch
          %644 = sbr.rel (%p642) target = $region64
        $region63: #{tpu_custom_call.1} parent=11 // pred_region
          %s646 = ssub.s32 64, 64
          %647 = vsyncadd [#allocation24], %s646
          %s649 = sshll.u32 [#allocation23], 4
          %s650 = int_to_ptr.vmem [resolvable:$true] %s649
          %652 = dma.hbm_to_vmem [thread:$0]  %s13, 64, %s650, [#allocation24]
        $region64: #{tpu_custom_call.1} parent=11 // pred_fallthru
          _
        // Predicated region
        $region65: #{tpu_custom_call.1} parent=11 // pred_check
          %p653 = pneg %p360
        $region66: #{tpu_custom_call.1} parent=11 // pred_check_branch
          %655 = sbr.rel (%p653) target = $region68
        $region67: #{tpu_custom_call.1} parent=11 // pred_region
          %s657 = ssub.s32 16, 16
          %658 = vsyncadd [#allocation24], %s657
          %s660 = sshll.u32 [#allocation25], 4
          %s661 = int_to_ptr.vmem [resolvable:$true] %s660
          %663 = dma.hbm_to_vmem [thread:$0]  %s14, 16, %s661, [#allocation24]
        $region68: #{tpu_custom_call.1} parent=11 // pred_fallthru
          _
        // Predicated region
        $region69: #{tpu_custom_call.1} parent=11 // pred_check
          %p664 = pneg %p381
        $region70: #{tpu_custom_call.1} parent=11 // pred_check_branch
          %666 = sbr.rel (%p664) target = $region72
        $region71: #{tpu_custom_call.1} parent=11 // pred_region
          %s668 = ssub.s32 16, 16
          %669 = vsyncadd [#allocation27], %s668
          %s671 = sshll.u32 [#allocation26], 4
          %s672 = int_to_ptr.vmem [resolvable:$true] %s671
          %674 = dma.hbm_to_vmem [thread:$0]  %s15, 16, %s672, [#allocation27]
        $region72: #{tpu_custom_call.1} parent=11 // pred_fallthru
          _
        // Predicated region
        $region73: #{tpu_custom_call.1} parent=11 // pred_check
          %p675 = pneg %p402
        $region74: #{tpu_custom_call.1} parent=11 // pred_check_branch
          %677 = sbr.rel (%p675) target = $region76
        $region75: #{tpu_custom_call.1} parent=11 // pred_region
          %s679 = ssub.s32 16, 16
          %680 = vsyncadd [#allocation27], %s679
          %s682 = sshll.u32 [#allocation28], 4
          %s683 = int_to_ptr.vmem [resolvable:$true] %s682
          %685 = dma.hbm_to_vmem [thread:$0]  %s16, 16, %s683, [#allocation27]
        $region76: #{tpu_custom_call.1} parent=11 // pred_fallthru
          _
        // Predicated region
        $region77: #{tpu_custom_call.1} parent=11 // pred_check
          %p686 = pneg %p423
        $region78: #{tpu_custom_call.1} parent=11 // pred_check_branch
          %688 = sbr.rel (%p686) target = $region80
        $region79: #{tpu_custom_call.1} parent=11 // pred_region
          _
        $region80: #{tpu_custom_call.1} parent=11 // pred_fallthru
          _
        // Predicated region
        $region81: #{tpu_custom_call.1} parent=11 // pred_check
          %p689 = pneg %p444
        $region82: #{tpu_custom_call.1} parent=11 // pred_check_branch
          %691 = sbr.rel (%p689) target = $region84
        $region83: #{tpu_custom_call.1} parent=11 // pred_region
          _
        $region84: #{tpu_custom_call.1} parent=11 // pred_fallthru
          _
        // Predicated region
        $region85: #{tpu_custom_call.1} parent=11 // pred_check
          %p692 = pneg %p465
        $region86: #{tpu_custom_call.1} parent=11 // pred_check_branch
          %694 = sbr.rel (%p692) target = $region88
        $region87: #{tpu_custom_call.1} parent=11 // pred_region
          _
        $region88: #{tpu_custom_call.1} parent=11 // pred_fallthru
          _
      $region12: #{tpu_custom_call.1} parent=5 // pred_fallthru
        _
      %p695 = scmp.lt.s32.totalorder %s40, 4
      // Predicated region
      $region89: #{tpu_custom_call.1} parent=5 // pred_check
        %p696 = pneg %p695
      $region90: #{tpu_custom_call.1} parent=5 // pred_check_branch
        %698 = sbr.rel (%p696) target = $region92
      $region91: #{tpu_custom_call.1} parent=5 // pred_region
        // Predicated region
        $region93: #{tpu_custom_call.1} parent=91 // pred_check
          %p699 = pneg %p60
        $region94: #{tpu_custom_call.1} parent=91 // pred_check_branch
          %701 = sbr.rel (%p699) target = $region96
        $region95: #{tpu_custom_call.1} parent=91 // pred_region
          %s702 = sand.u32 %s50, 1
          %s703 = scalar_lea.sflag [#allocation3], %s702
          %s704 = sand.u32 %s50, 1
          %s705 = smul.addr %s704, 32
          %s706 = scalar_lea.vmem [#allocation2], %s705
          %s707 = smul.u32 2, %s40
          %s709 = ssub.s32 512, 512
          %710 = vsyncadd %s703, %s709
          %s711 = smul.addr %s707, 2
          %s712 = smul.addr %s711, 128
          %s713 = scalar_lea.hbm %s0, %s712
          %s714 = sshll.u32 %s706, 4
          %s715 = int_to_ptr.vmem [resolvable:$true] %s714
          %720 = dma.hbm_to_vmem [thread:$0]  %s713, 512, %s715, %s703, 128, 128, 8
        $region96: #{tpu_custom_call.1} parent=91 // pred_fallthru
          _
      $region92: #{tpu_custom_call.1} parent=5 // pred_fallthru
        _
      %p721 = scmp.le.s32.totalorder 1, %s40
      %p722 = scmp.lt.s32.totalorder %s40, 5
      %p723 = pnand %p721, %p722
      %p724 = pneg %p723
      // Predicated region
      $region97: #{tpu_custom_call.1} parent=5 // pred_check
        _
      $region98: #{tpu_custom_call.1} parent=5 // pred_check_branch
        %726 = sbr.rel (%p723) target = $region100
      $region99: #{tpu_custom_call.1} parent=5 // pred_region
        %s727 = ssub.s32 %s40, 1
        %s728 = sand.u32 %s53, 1
        %s729 = scalar_lea.sflag [#allocation3], %s728
        %s730 = sand.u32 %s53, 1
        %s731 = smul.addr %s730, 32
        %s732 = scalar_lea.vmem [#allocation2], %s731
        // Predicated region
        $region101: #{tpu_custom_call.1} parent=99 // pred_check
          %p733 = pneg %p66
        $region102: #{tpu_custom_call.1} parent=99 // pred_check_branch
          %735 = sbr.rel (%p733) target = $region104
        $region103: #{tpu_custom_call.1} parent=99 // pred_region
          %736 = dma.done %s729, 512
        $region104: #{tpu_custom_call.1} parent=99 // pred_fallthru
          _
        // Predicated region
        $region105: #{tpu_custom_call.1} parent=99 // pred_check
          %p737 = pneg %p87
        $region106: #{tpu_custom_call.1} parent=99 // pred_check_branch
          %739 = sbr.rel (%p737) target = $region108
        $region107: #{tpu_custom_call.1} parent=99 // pred_region
          %740 = dma.done [#allocation6], 1024
        $region108: #{tpu_custom_call.1} parent=99 // pred_fallthru
          _
        // Predicated region
        $region109: #{tpu_custom_call.1} parent=99 // pred_check
          %p741 = pneg %p108
        $region110: #{tpu_custom_call.1} parent=99 // pred_check_branch
          %743 = sbr.rel (%p741) target = $region112
        $region111: #{tpu_custom_call.1} parent=99 // pred_region
          %744 = dma.done [#allocation6], 16
        $region112: #{tpu_custom_call.1} parent=99 // pred_fallthru
          _
        // Predicated region
        $region113: #{tpu_custom_call.1} parent=99 // pred_check
          %p745 = pneg %p129
        $region114: #{tpu_custom_call.1} parent=99 // pred_check_branch
          %747 = sbr.rel (%p745) target = $region116
        $region115: #{tpu_custom_call.1} parent=99 // pred_region
          %748 = dma.done [#allocation9], 16
        $region116: #{tpu_custom_call.1} parent=99 // pred_fallthru
          _
        // Predicated region
        $region117: #{tpu_custom_call.1} parent=99 // pred_check
          %p749 = pneg %p150
        $region118: #{tpu_custom_call.1} parent=99 // pred_check_branch
          %751 = sbr.rel (%p749) target = $region120
        $region119: #{tpu_custom_call.1} parent=99 // pred_region
          %752 = dma.done [#allocation9], 16
        $region120: #{tpu_custom_call.1} parent=99 // pred_fallthru
          _
        // Predicated region
        $region121: #{tpu_custom_call.1} parent=99 // pred_check
          %p753 = pneg %p171
        $region122: #{tpu_custom_call.1} parent=99 // pred_check_branch
          %755 = sbr.rel (%p753) target = $region124
        $region123: #{tpu_custom_call.1} parent=99 // pred_region
          %756 = dma.done [#allocation12], 16
        $region124: #{tpu_custom_call.1} parent=99 // pred_fallthru
          _
        // Predicated region
        $region125: #{tpu_custom_call.1} parent=99 // pred_check
          %p757 = pneg %p192
        $region126: #{tpu_custom_call.1} parent=99 // pred_check_branch
          %759 = sbr.rel (%p757) target = $region128
        $region127: #{tpu_custom_call.1} parent=99 // pred_region
          %760 = dma.done [#allocation12], 16
        $region128: #{tpu_custom_call.1} parent=99 // pred_fallthru
          _
        // Predicated region
        $region129: #{tpu_custom_call.1} parent=99 // pred_check
          %p761 = pneg %p213
        $region130: #{tpu_custom_call.1} parent=99 // pred_check_branch
          %763 = sbr.rel (%p761) target = $region132
        $region131: #{tpu_custom_call.1} parent=99 // pred_region
          %764 = dma.done [#allocation15], 16
        $region132: #{tpu_custom_call.1} parent=99 // pred_fallthru
          _
        // Predicated region
        $region133: #{tpu_custom_call.1} parent=99 // pred_check
          %p765 = pneg %p234
        $region134: #{tpu_custom_call.1} parent=99 // pred_check_branch
          %767 = sbr.rel (%p765) target = $region136
        $region135: #{tpu_custom_call.1} parent=99 // pred_region
          %768 = dma.done [#allocation15], 16
        $region136: #{tpu_custom_call.1} parent=99 // pred_fallthru
          _
        // Predicated region
        $region137: #{tpu_custom_call.1} parent=99 // pred_check
          %p769 = pneg %p255
        $region138: #{tpu_custom_call.1} parent=99 // pred_check_branch
          %771 = sbr.rel (%p769) target = $region140
        $region139: #{tpu_custom_call.1} parent=99 // pred_region
          %772 = dma.done [#allocation18], 16
        $region140: #{tpu_custom_call.1} parent=99 // pred_fallthru
          _
        // Predicated region
        $region141: #{tpu_custom_call.1} parent=99 // pred_check
          %p773 = pneg %p276
        $region142: #{tpu_custom_call.1} parent=99 // pred_check_branch
          %775 = sbr.rel (%p773) target = $region144
        $region143: #{tpu_custom_call.1} parent=99 // pred_region
          %776 = dma.done [#allocation18], 16
        $region144: #{tpu_custom_call.1} parent=99 // pred_fallthru
          _
        // Predicated region
        $region145: #{tpu_custom_call.1} parent=99 // pred_check
          %p777 = pneg %p297
        $region146: #{tpu_custom_call.1} parent=99 // pred_check_branch
          %779 = sbr.rel (%p777) target = $region148
        $region147: #{tpu_custom_call.1} parent=99 // pred_region
          %780 = dma.done [#allocation21], 128
        $region148: #{tpu_custom_call.1} parent=99 // pred_fallthru
          _
        // Predicated region
        $region149: #{tpu_custom_call.1} parent=99 // pred_check
          %p781 = pneg %p318
        $region150: #{tpu_custom_call.1} parent=99 // pred_check_branch
          %783 = sbr.rel (%p781) target = $region152
        $region151: #{tpu_custom_call.1} parent=99 // pred_region
          %784 = dma.done [#allocation21], 16
        $region152: #{tpu_custom_call.1} parent=99 // pred_fallthru
          _
        // Predicated region
        $region153: #{tpu_custom_call.1} parent=99 // pred_check
          %p785 = pneg %p339
        $region154: #{tpu_custom_call.1} parent=99 // pred_check_branch
          %787 = sbr.rel (%p785) target = $region156
        $region155: #{tpu_custom_call.1} parent=99 // pred_region
          %788 = dma.done [#allocation24], 64
        $region156: #{tpu_custom_call.1} parent=99 // pred_fallthru
          _
        // Predicated region
        $region157: #{tpu_custom_call.1} parent=99 // pred_check
          %p789 = pneg %p360
        $region158: #{tpu_custom_call.1} parent=99 // pred_check_branch
          %791 = sbr.rel (%p789) target = $region160
        $region159: #{tpu_custom_call.1} parent=99 // pred_region
          %792 = dma.done [#allocation24], 16
        $region160: #{tpu_custom_call.1} parent=99 // pred_fallthru
          _
        // Predicated region
        $region161: #{tpu_custom_call.1} parent=99 // pred_check
          %p793 = pneg %p381
        $region162: #{tpu_custom_call.1} parent=99 // pred_check_branch
          %795 = sbr.rel (%p793) target = $region164
        $region163: #{tpu_custom_call.1} parent=99 // pred_region
          %796 = dma.done [#allocation27], 16
        $region164: #{tpu_custom_call.1} parent=99 // pred_fallthru
          _
        // Predicated region
        $region165: #{tpu_custom_call.1} parent=99 // pred_check
          %p797 = pneg %p402
        $region166: #{tpu_custom_call.1} parent=99 // pred_check_branch
          %799 = sbr.rel (%p797) target = $region168
        $region167: #{tpu_custom_call.1} parent=99 // pred_region
          %800 = dma.done [#allocation27], 16
        $region168: #{tpu_custom_call.1} parent=99 // pred_fallthru
          _
        %s801 = sand.u32 %s53, 1
        %s802 = scalar_lea.sflag [#allocation3], %s801
        %s803 = sand.u32 %s53, 1
        %s804 = smul.addr %s803, 32
        %s805 = scalar_lea.vmem [#allocation2], %s804
        %p806 = pneg %p66
        %p807 = pneg %p63
        %p808 = pneg %p87
        %p809 = pneg %p84
        %p810 = pneg %p108
        %p811 = pneg %p105
        %p812 = pneg %p129
        %p813 = pneg %p126
        %p814 = pneg %p150
        %p815 = pneg %p147
        %p816 = pneg %p171
        %p817 = pneg %p168
        %p818 = pneg %p192
        %p819 = pneg %p189
        %p820 = pneg %p213
        %p821 = pneg %p210
        %p822 = pneg %p234
        %p823 = pneg %p231
        %p824 = pneg %p255
        %p825 = pneg %p252
        %p826 = pneg %p276
        %p827 = pneg %p273
        %p828 = pneg %p297
        %p829 = pneg %p294
        %p830 = pneg %p318
        %p831 = pneg %p315
        %p832 = pneg %p339
        %p833 = pneg %p336
        %p834 = pneg %p360
        %p835 = pneg %p357
        %p836 = pneg %p381
        %p837 = pneg %p378
        %p838 = pneg %p402
        %p839 = pneg %p399
        %p840 = pneg %p423
        %p841 = pneg %p420
        %p842 = pneg %p444
        %p843 = pneg %p441
        %p844 = pneg %p465
        %p845 = pneg %p462
        %p846 = pneg %p491
        %p847 = pneg %p488
        %s848 = sand.u32 %s478, 1
        %s849 = scalar_lea.sflag [#allocation4], %s848
        %s850 = sand.u32 %s478, 1
        %s851 = smul.addr %s850, 32
        %s852 = scalar_lea.vmem [#allocation29], %s851
        %s853 = smul.u32 2, %s45
        %s854 = smul.u32 2, %s45
        %v856 = vld [vmem:[%s732] sm:$0xff]
        %v857 = vld [vmem:[%s732 + $0x8] sm:$0xff]
        %v858 = vld [vmem:[%s732 + $0x10] sm:$0xff]
        %v859 = vld [vmem:[%s732 + $0x18] sm:$0xff]
        %v860 = vpack.c.bf16 %v857, %v856
        %v861 = vpack.c.bf16 %v859, %v858
        %v862 = vlaneseq
        %v863 = vshrl.u32 %v862, 7
        %v864 = vadd.s32 %v863, 8
        %v865 = vld [vmem:[#allocation5] sm:$0xff]
        %v866 = vld [vmem:[#allocation5 + $0x8] sm:$0xff]
        %v867 = vld [vmem:[#allocation5 + $0x10] sm:$0xff]
        %v868 = vld [vmem:[#allocation5 + $0x18] sm:$0xff]
        %v869 = vld [vmem:[#allocation5 + $0x20] sm:$0xff]
        %v870 = vld [vmem:[#allocation5 + $0x28] sm:$0xff]
        %v871 = vld [vmem:[#allocation5 + $0x30] sm:$0xff]
        %v872 = vld [vmem:[#allocation5 + $0x38] sm:$0xff]
        %v881 = vunpack.c.l.b16 %v865
        %v882 = vunpack.c.h.b16 %v865
        %v883 = vunpack.c.l.b16 %v866
        %v884 = vunpack.c.h.b16 %v866
        %v885 = vunpack.c.l.b16 %v867
        %v886 = vunpack.c.h.b16 %v867
        %v887 = vunpack.c.l.b16 %v868
        %v888 = vunpack.c.h.b16 %v868
        %v889 = vunpack.c.l.b16 %v869
        %v890 = vunpack.c.h.b16 %v869
        %v891 = vunpack.c.l.b16 %v870
        %v892 = vunpack.c.h.b16 %v870
        %v893 = vunpack.c.l.b16 %v871
        %v894 = vunpack.c.h.b16 %v871
        %v895 = vunpack.c.l.b16 %v872
        %v896 = vunpack.c.h.b16 %v872
        %v897 = vpack.c.b16 %v883, %v881
        %v898 = vpack.c.b16 %v884, %v882
        %v899 = vpack.c.b16 %v887, %v885
        %v900 = vpack.c.b16 %v888, %v886
        %v901 = vpack.c.b16 %v891, %v889
        %v902 = vpack.c.b16 %v892, %v890
        %v903 = vpack.c.b16 %v895, %v893
        %v904 = vpack.c.b16 %v896, %v894
        %vm913 = vcmask 523264
        %v915 = vsel %vm913, %v860, 0
        %v918 = vsel %vm913, %v861, 0
        %920 = vmatprep.subr.bf16.mxu0 %v898
        %921 = vmatpush1.bf16.msra.mxu0 %v897
        %922 = vmatprep.subr.bf16.mxu0 %v900
        %923 = vmatpush1.bf16.msra.mxu0 %v899
        %924 = vmatprep.subr.bf16.mxu0 %v902
        %925 = vmatpush1.bf16.msra.mxu0 %v901
        %926 = vmatprep.subr.bf16.mxu0 %v904
        %927 = vmatpush1.bf16.msra.mxu0 %v903
        %928 = vmatprep.subr.bf16.mxu0 0
        %929 = vmatpush1.bf16.msra.mxu0 0
        %930 = vmatprep.subr.bf16.mxu0 0
        %931 = vmatpush1.bf16.msra.mxu0 0
        %932 = vmatprep.subr.bf16.mxu0 0
        %933 = vmatpush1.bf16.msra.mxu0 0
        %934 = vmatprep.subr.bf16.mxu0 0
        %935 = vmatpush1.bf16.msra.mxu0 0
        %936 = vmatprep.subr.bf16.mxu0 0
        %937 = vmatpush1.bf16.msra.mxu0 0
        %938 = vmatprep.subr.bf16.mxu0 0
        %939 = vmatpush1.bf16.msra.mxu0 0
        %940 = vmatprep.subr.bf16.mxu0 0
        %941 = vmatpush1.bf16.msra.mxu0 0
        %942 = vmatprep.subr.bf16.mxu0 0
        %943 = vmatpush1.bf16.msra.mxu0 0
        %944 = vmatprep.subr.bf16.mxu0 0
        %945 = vmatpush1.bf16.msra.mxu0 0
        %946 = vmatprep.subr.bf16.mxu0 0
        %947 = vmatpush1.bf16.msra.mxu0 0
        %948 = vmatprep.subr.bf16.mxu0 0
        %949 = vmatpush1.bf16.msra.mxu0 0
        %950 = vmatprep.subr.bf16.mxu0 0
        %951 = vmatpush1.bf16.msra.mxu0 0
        %952 = vmatprep.mubr.bf16.mxu0 0
        %953 = vmatmul.mubr.bf16.gmra.mrb[0].mxu0 %v915
        %v954 = vpop.f32.mrb[0].mxu0
        %v955 = vadd.f32 0.0, %v954
        %v956 = vpop.f32.mrb[0].mxu0
        %v957 = vadd.f32 0.0, %v956
        %v958 = vpop.f32.mrb[0].mxu0
        %v959 = vadd.f32 0.0, %v958
        %v960 = vpop.f32.mrb[0].mxu0
        %v961 = vadd.f32 0.0, %v960
        %962 = vmatprep.mubr.bf16.mxu0 0
        %963 = vmatmul.mubr.bf16.gmra.mrb[0].mxu0 %v918
        %v964 = vpop.f32.mrb[0].mxu0
        %v965 = vadd.f32 0.0, %v964
        %v966 = vpop.f32.mrb[0].mxu0
        %v967 = vadd.f32 0.0, %v966
        %v968 = vpop.f32.mrb[0].mxu0
        %v969 = vadd.f32 0.0, %v968
        %v970 = vpop.f32.mrb[0].mxu0
        %v971 = vadd.f32 0.0, %v970
        %972 = vdwg.mxu0
        %vm973 = vcmp.ge.s32.totalorder %v863, 1
        %vm974 = vcmp.ge.s32.totalorder %v864, 1
        %v975 = vrot.slane %v955, 7
        %v976 = vrot.slane %v959, 7
        %v977 = vrot.slane %v965, 7
        %v978 = vrot.slane %v969, 7
        %vm979 = vcmp.lt.s32.totalorder %v863, 1
        %v980 = vsel %vm979, %v977, %v978
        %v981 = vsel %vm979, %v976, %v977
        %v982 = vsel %vm979, %v975, %v976
        %v983 = vsel %vm979, %v978, %v975
        %v984 = vsel %vm973, 1, 0
        %v985 = vsel %vm974, 1, 0
        %vm986 = vcmp.eq.s32.totalorder %v984, 1
        %vm987 = vcmp.eq.s32.totalorder %v985, 1
        %v988 = vsel %vm986, %v983, 0.0
        %v989 = vsel %vm987, %v982, 0.0
        %v990 = vsel %vm986, %v981, 0.0
        %v991 = vsel %vm987, %v980, 0.0
        %vm992 = vcmp.lt.s32.totalorder %v863, 15
        %vm993 = vcmp.lt.s32.totalorder %v864, 15
        %998 = vrot.lane.b32.xlu0 %v955, 96
        %v999 = vpop.permute.xlu0 %998
        %1000 = vrot.lane.b32.xlu0 %v959, 96
        %v1001 = vpop.permute.xlu0 %1000
        %1002 = vrot.lane.b32.xlu0 %v965, 96
        %v1003 = vpop.permute.xlu0 %1002
        %1004 = vrot.lane.b32.xlu0 %v969, 96
        %v1005 = vpop.permute.xlu0 %1004
        %v1010 = vrot.slane %v999, 1
        %v1011 = vrot.slane %v1001, 1
        %v1012 = vrot.slane %v1003, 1
        %v1013 = vrot.slane %v1005, 1
        %vm1014 = vcmp.lt.s32.totalorder %v863, 7
        %v1015 = vsel %vm1014, %v1012, %v1013
        %v1016 = vsel %vm1014, %v1011, %v1012
        %v1017 = vsel %vm1014, %v1010, %v1011
        %v1018 = vsel %vm1014, %v1013, %v1010
        %v1019 = vsel %vm992, 1, 0
        %v1020 = vsel %vm993, 1, 0
        %vm1021 = vcmp.eq.s32.totalorder %v1019, 1
        %vm1022 = vcmp.eq.s32.totalorder %v1020, 1
        %v1023 = vsel %vm1021, %v1017, 0.0
        %v1024 = vsel %vm1022, %v1016, 0.0
        %v1025 = vsel %vm1021, %v1015, 0.0
        %v1026 = vsel %vm1022, %v1018, 0.0
        %1027 = vrot.lane.b32.xlu0 %v955, 112
        %v1028 = vpop.permute.xlu0 %1027
        %1029 = vrot.lane.b32.xlu0 %v959, 112
        %v1030 = vpop.permute.xlu0 %1029
        %1031 = vrot.lane.b32.xlu0 %v965, 112
        %v1032 = vpop.permute.xlu0 %1031
        %1033 = vrot.lane.b32.xlu0 %v969, 112
        %v1034 = vpop.permute.xlu0 %1033
        %v1039 = vadd.f32 %v988, %v1028
        %v1040 = vadd.f32 %v989, %v1030
        %v1041 = vadd.f32 %v990, %v1032
        %v1042 = vadd.f32 %v991, %v1034
        %v1043 = vadd.f32 %v1039, %v1023
        %v1044 = vadd.f32 %v1040, %v1024
        %v1045 = vadd.f32 %v1041, %v1025
        %v1046 = vadd.f32 %v1042, %v1026
        %v1047 = vld [vmem:[#allocation7] sm:$0x1]
        %v1049 = vlaneseq
        %v1050 = vshrl.u32 %v1049, 7
        %v1051 = vsub.s32 0, %v1050
        %v1052 = vrot.slane %v1047, %v1051
        %v1054 = vadd.f32 %v1043, %v1052
        %v1055 = vadd.f32 %v1044, %v1052
        %v1056 = vadd.f32 %v1045, %v1052
        %v1057 = vadd.f32 %v1046, %v1052
        %v1058 = vmax.f32 %v1054, 0.0
        %v1059 = vmax.f32 %v1055, 0.0
        %v1060 = vmax.f32 %v1056, 0.0
        %v1061 = vmax.f32 %v1057, 0.0
        %v1062 = vld [vmem:[#allocation8] sm:$0x1]
        %v1064 = vlaneseq
        %v1065 = vshrl.u32 %v1064, 7
        %v1066 = vsub.s32 0, %v1065
        %v1067 = vrot.slane %v1062, %v1066
        %v1069 = vmul.f32 %v1058, %v1067
        %v1070 = vmul.f32 %v1059, %v1067
        %v1071 = vmul.f32 %v1060, %v1067
        %v1072 = vmul.f32 %v1061, %v1067
        %v1073 = vld [vmem:[#allocation10] sm:$0x1]
        %v1075 = vlaneseq
        %v1076 = vshrl.u32 %v1075, 7
        %v1077 = vsub.s32 0, %v1076
        %v1078 = vrot.slane %v1073, %v1077
        %v1080 = vadd.f32 %v1069, %v1078
        %v1081 = vadd.f32 %v1070, %v1078
        %v1082 = vadd.f32 %v1071, %v1078
        %v1083 = vadd.f32 %v1072, %v1078
        %vm1084 = vcmp.ge.s32.totalorder %v863, 2
        %vm1085 = vcmp.ge.s32.totalorder %v864, 2
        %1086 = vrot.lane.b32.xlu0 %v955, 80
        %v1087 = vpop.permute.xlu0 %1086
        %1088 = vrot.lane.b32.xlu0 %v959, 80
        %v1089 = vpop.permute.xlu0 %1088
        %1090 = vrot.lane.b32.xlu0 %v965, 80
        %v1091 = vpop.permute.xlu0 %1090
        %1092 = vrot.lane.b32.xlu0 %v969, 80
        %v1093 = vpop.permute.xlu0 %1092
        %v1098 = vrot.slane %v1087, 6
        %v1099 = vrot.slane %v1089, 6
        %v1100 = vrot.slane %v1091, 6
        %v1101 = vrot.slane %v1093, 6
        %vm1102 = vcmp.lt.s32.totalorder %v863, 2
        %v1103 = vsel %vm1102, %v1100, %v1101
        %v1104 = vsel %vm1102, %v1099, %v1100
        %v1105 = vsel %vm1102, %v1098, %v1099
        %v1106 = vsel %vm1102, %v1101, %v1098
        %v1107 = vsel %vm1084, 1, 0
        %v1108 = vsel %vm1085, 1, 0
        %vm1109 = vcmp.eq.s32.totalorder %v1107, 1
        %vm1110 = vcmp.eq.s32.totalorder %v1108, 1
        %v1111 = vsel %vm1109, %v1106, 0.0
        %v1112 = vsel %vm1110, %v1105, 0.0
        %v1113 = vsel %vm1109, %v1104, 0.0
        %v1114 = vsel %vm1110, %v1103, 0.0
        %vm1115 = vcmp.lt.s32.totalorder %v863, 14
        %vm1116 = vcmp.lt.s32.totalorder %v864, 14
        %1117 = vrot.lane.b32.xlu0 %v955, 48
        %v1118 = vpop.permute.xlu0 %1117
        %1119 = vrot.lane.b32.xlu0 %v959, 48
        %v1120 = vpop.permute.xlu0 %1119
        %1121 = vrot.lane.b32.xlu0 %v965, 48
        %v1122 = vpop.permute.xlu0 %1121
        %1123 = vrot.lane.b32.xlu0 %v969, 48
        %v1124 = vpop.permute.xlu0 %1123
        %v1129 = vrot.slane %v1118, 2
        %v1130 = vrot.slane %v1120, 2
        %v1131 = vrot.slane %v1122, 2
        %v1132 = vrot.slane %v1124, 2
        %vm1133 = vcmp.lt.s32.totalorder %v863, 6
        %v1134 = vsel %vm1133, %v1131, %v1132
        %v1135 = vsel %vm1133, %v1130, %v1131
        %v1136 = vsel %vm1133, %v1129, %v1130
        %v1137 = vsel %vm1133, %v1132, %v1129
        %v1138 = vsel %vm1115, 1, 0
        %v1139 = vsel %vm1116, 1, 0
        %vm1140 = vcmp.eq.s32.totalorder %v1138, 1
        %vm1141 = vcmp.eq.s32.totalorder %v1139, 1
        %v1142 = vsel %vm1140, %v1136, 0.0
        %v1143 = vsel %vm1141, %v1135, 0.0
        %v1144 = vsel %vm1140, %v1134, 0.0
        %v1145 = vsel %vm1141, %v1137, 0.0
        %1146 = vrot.lane.b32.xlu0 %v955, 64
        %v1147 = vpop.permute.xlu0 %1146
        %1148 = vrot.lane.b32.xlu0 %v959, 64
        %v1149 = vpop.permute.xlu0 %1148
        %1150 = vrot.lane.b32.xlu0 %v965, 64
        %v1151 = vpop.permute.xlu0 %1150
        %1152 = vrot.lane.b32.xlu0 %v969, 64
        %v1153 = vpop.permute.xlu0 %1152
        %v1158 = vadd.f32 %v1111, %v1147
        %v1159 = vadd.f32 %v1112, %v1149
        %v1160 = vadd.f32 %v1113, %v1151
        %v1161 = vadd.f32 %v1114, %v1153
        %v1162 = vadd.f32 %v1158, %v1142
        %v1163 = vadd.f32 %v1159, %v1143
        %v1164 = vadd.f32 %v1160, %v1144
        %v1165 = vadd.f32 %v1161, %v1145
        %v1166 = vld [vmem:[#allocation11] sm:$0x1]
        %v1168 = vlaneseq
        %v1169 = vshrl.u32 %v1168, 7
        %v1170 = vsub.s32 0, %v1169
        %v1171 = vrot.slane %v1166, %v1170
        %v1173 = vadd.f32 %v1162, %v1171
        %v1174 = vadd.f32 %v1163, %v1171
        %v1175 = vadd.f32 %v1164, %v1171
        %v1176 = vadd.f32 %v1165, %v1171
        %v1177 = vmax.f32 %v1173, 0.0
        %v1178 = vmax.f32 %v1174, 0.0
        %v1179 = vmax.f32 %v1175, 0.0
        %v1180 = vmax.f32 %v1176, 0.0
        %v1181 = vld [vmem:[#allocation13] sm:$0x1]
        %v1183 = vlaneseq
        %v1184 = vshrl.u32 %v1183, 7
        %v1185 = vsub.s32 0, %v1184
        %v1186 = vrot.slane %v1181, %v1185
        %v1188 = vmul.f32 %v1177, %v1186
        %v1189 = vmul.f32 %v1178, %v1186
        %v1190 = vmul.f32 %v1179, %v1186
        %v1191 = vmul.f32 %v1180, %v1186
        %v1192 = vld [vmem:[#allocation14] sm:$0x1]
        %v1194 = vlaneseq
        %v1195 = vshrl.u32 %v1194, 7
        %v1196 = vsub.s32 0, %v1195
        %v1197 = vrot.slane %v1192, %v1196
        %v1199 = vadd.f32 %v1188, %v1197
        %v1200 = vadd.f32 %v1189, %v1197
        %v1201 = vadd.f32 %v1190, %v1197
        %v1202 = vadd.f32 %v1191, %v1197
        %vm1203 = vcmp.ge.s32.totalorder %v863, 4
        %vm1204 = vcmp.ge.s32.totalorder %v864, 4
        %1205 = vrot.lane.b32.xlu0 %v955, 32
        %v1206 = vpop.permute.xlu0 %1205
        %1207 = vrot.lane.b32.xlu0 %v959, 32
        %v1208 = vpop.permute.xlu0 %1207
        %1209 = vrot.lane.b32.xlu0 %v965, 32
        %v1210 = vpop.permute.xlu0 %1209
        %1211 = vrot.lane.b32.xlu0 %v969, 32
        %v1212 = vpop.permute.xlu0 %1211
        %v1217 = vrot.slane %v1206, 4
        %v1218 = vrot.slane %v1208, 4
        %v1219 = vrot.slane %v1210, 4
        %v1220 = vrot.slane %v1212, 4
        %vm1221 = vcmp.lt.s32.totalorder %v863, 4
        %v1222 = vsel %vm1221, %v1219, %v1220
        %v1223 = vsel %vm1221, %v1218, %v1219
        %v1224 = vsel %vm1221, %v1217, %v1218
        %v1225 = vsel %vm1221, %v1220, %v1217
        %v1226 = vsel %vm1203, 1, 0
        %v1227 = vsel %vm1204, 1, 0
        %vm1228 = vcmp.eq.s32.totalorder %v1226, 1
        %vm1229 = vcmp.eq.s32.totalorder %v1227, 1
        %v1230 = vsel %vm1228, %v1225, 0.0
        %v1231 = vsel %vm1229, %v1224, 0.0
        %v1232 = vsel %vm1228, %v1223, 0.0
        %v1233 = vsel %vm1229, %v1222, 0.0
        %vm1234 = vcmp.lt.s32.totalorder %v863, 12
        %vm1235 = vcmp.lt.s32.totalorder %v864, 12
        %v1236 = vrot.slane %v957, 4
        %v1237 = vrot.slane %v961, 4
        %v1238 = vrot.slane %v967, 4
        %v1239 = vrot.slane %v971, 4
        %v1240 = vsel %vm1221, %v1238, %v1239
        %v1241 = vsel %vm1221, %v1237, %v1238
        %v1242 = vsel %vm1221, %v1236, %v1237
        %v1243 = vsel %vm1221, %v1239, %v1236
        %v1244 = vsel %vm1234, 1, 0
        %v1245 = vsel %vm1235, 1, 0
        %vm1246 = vcmp.eq.s32.totalorder %v1244, 1
        %vm1247 = vcmp.eq.s32.totalorder %v1245, 1
        %v1248 = vsel %vm1246, %v1242, 0.0
        %v1249 = vsel %vm1247, %v1241, 0.0
        %v1250 = vsel %vm1246, %v1240, 0.0
        %v1251 = vsel %vm1247, %v1243, 0.0
        %1252 = vrot.lane.b32.xlu0 %v955, 16
        %v1253 = vpop.permute.xlu0 %1252
        %1254 = vrot.lane.b32.xlu0 %v959, 16
        %v1255 = vpop.permute.xlu0 %1254
        %1256 = vrot.lane.b32.xlu0 %v965, 16
        %v1257 = vpop.permute.xlu0 %1256
        %1258 = vrot.lane.b32.xlu0 %v969, 16
        %v1259 = vpop.permute.xlu0 %1258
        %v1264 = vadd.f32 %v1230, %v1253
        %v1265 = vadd.f32 %v1231, %v1255
        %v1266 = vadd.f32 %v1232, %v1257
        %v1267 = vadd.f32 %v1233, %v1259
        %v1268 = vadd.f32 %v1264, %v1248
        %v1269 = vadd.f32 %v1265, %v1249
        %v1270 = vadd.f32 %v1266, %v1250
        %v1271 = vadd.f32 %v1267, %v1251
        %v1272 = vld [vmem:[#allocation16] sm:$0x1]
        %v1274 = vlaneseq
        %v1275 = vshrl.u32 %v1274, 7
        %v1276 = vsub.s32 0, %v1275
        %v1277 = vrot.slane %v1272, %v1276
        %v1279 = vadd.f32 %v1268, %v1277
        %v1280 = vadd.f32 %v1269, %v1277
        %v1281 = vadd.f32 %v1270, %v1277
        %v1282 = vadd.f32 %v1271, %v1277
        %v1283 = vmax.f32 %v1279, 0.0
        %v1284 = vmax.f32 %v1280, 0.0
        %v1285 = vmax.f32 %v1281, 0.0
        %v1286 = vmax.f32 %v1282, 0.0
        %v1287 = vld [vmem:[#allocation17] sm:$0x1]
        %v1289 = vlaneseq
        %v1290 = vshrl.u32 %v1289, 7
        %v1291 = vsub.s32 0, %v1290
        %v1292 = vrot.slane %v1287, %v1291
        %v1294 = vmul.f32 %v1283, %v1292
        %v1295 = vmul.f32 %v1284, %v1292
        %v1296 = vmul.f32 %v1285, %v1292
        %v1297 = vmul.f32 %v1286, %v1292
        %v1298 = vld [vmem:[#allocation19] sm:$0x1]
        %v1300 = vlaneseq
        %v1301 = vshrl.u32 %v1300, 7
        %v1302 = vsub.s32 0, %v1301
        %v1303 = vrot.slane %v1298, %v1302
        %v1305 = vadd.f32 %v1294, %v1303
        %v1306 = vadd.f32 %v1295, %v1303
        %v1307 = vadd.f32 %v1296, %v1303
        %v1308 = vadd.f32 %v1297, %v1303
        %v1309 = vmax.f32 %v957, 0.0
        %v1310 = vmax.f32 %v961, 0.0
        %v1311 = vmax.f32 %v967, 0.0
        %v1312 = vmax.f32 %v971, 0.0
        %v1313 = vpack.c.bf16 %v1310, %v1309
        %v1314 = vpack.c.bf16 %v1312, %v1311
        %v1315 = vld [vmem:[#allocation20] sm:$0xf]
        %v1316 = vld [vmem:[#allocation20 + $0x4] sm:$0xf]
        %v1317 = vld [vmem:[#allocation22] sm:$0x1]
        %v1319 = vlaneseq
        %v1320 = vshrl.u32 %v1319, 7
        %v1321 = vsub.s32 0, %v1320
        %v1322 = vrot.slane %v1317, %v1321
        %1326 = vrot.lane.b32.xlu0 %v1313, 112
        %v1327 = vpop.permute.xlu0 %1326
        %1328 = vrot.lane.b32.xlu0 %v1314, 112
        %v1329 = vpop.permute.xlu0 %1328
        %v1332 = vunpack.c.l.b16 %v1315
        %v1333 = vunpack.c.l.b16 %v1316
        %v1334 = vpack.c.b16 %v1333, %v1332
        %vm1336 = vcmask 130048
        %v1338 = vsel %vm1336, %v1327, 0
        %v1341 = vsel %vm1336, %v1329, 0
        %1343 = vmatprep.subr.bf16.mxu0 0
        %1344 = vmatpush1.bf16.msra.mxu0 %v1334
        %1345 = vmatprep.subr.bf16.mxu0 0
        %1346 = vmatpush1.bf16.msra.mxu0 0
        %1347 = vmatprep.subr.bf16.mxu0 0
        %1348 = vmatpush1.bf16.msra.mxu0 0
        %1349 = vmatprep.subr.bf16.mxu0 0
        %1350 = vmatpush1.bf16.msra.mxu0 0
        %1351 = vmatprep.subr.bf16.mxu0 0
        %1352 = vmatpush1.bf16.msra.mxu0 0
        %1353 = vmatprep.subr.bf16.mxu0 0
        %1354 = vmatpush1.bf16.msra.mxu0 0
        %1355 = vmatprep.subr.bf16.mxu0 0
        %1356 = vmatpush1.bf16.msra.mxu0 0
        %1357 = vmatprep.subr.bf16.mxu0 0
        %1358 = vmatpush1.bf16.msra.mxu0 0
        %1359 = vmatprep.subr.bf16.mxu0 0
        %1360 = vmatpush1.bf16.msra.mxu0 0
        %1361 = vmatprep.subr.bf16.mxu0 0
        %1362 = vmatpush1.bf16.msra.mxu0 0
        %1363 = vmatprep.subr.bf16.mxu0 0
        %1364 = vmatpush1.bf16.msra.mxu0 0
        %1365 = vmatprep.subr.bf16.mxu0 0
        %1366 = vmatpush1.bf16.msra.mxu0 0
        %1367 = vmatprep.subr.bf16.mxu0 0
        %1368 = vmatpush1.bf16.msra.mxu0 0
        %1369 = vmatprep.subr.bf16.mxu0 0
        %1370 = vmatpush1.bf16.msra.mxu0 0
        %1371 = vmatprep.subr.bf16.mxu0 0
        %1372 = vmatpush1.bf16.msra.mxu0 0
        %1373 = vmatprep.subr.bf16.mxu0 0
        %1374 = vmatpush1.bf16.msra.mxu0 0
        %1375 = vmatprep.mubr.bf16.mxu0 0
        %1376 = vmatmul.mubr.bf16.gmra.mrb[0].mxu0 %v1338
        %v1377 = vpop.f32.mrb[0].mxu0
        %v1378 = vadd.f32 %v1322, %v1377
        %v1379 = vpop.f32.mrb[0].mxu0
        %v1380 = vpop.f32.mrb[0].mxu0
        %v1381 = vadd.f32 %v1322, %v1380
        %v1382 = vpop.f32.mrb[0].mxu0
        %1383 = vmatprep.mubr.bf16.mxu0 0
        %1384 = vmatmul.mubr.bf16.gmra.mrb[0].mxu0 %v1341
        %v1385 = vpop.f32.mrb[0].mxu0
        %v1386 = vadd.f32 %v1322, %v1385
        %v1387 = vpop.f32.mrb[0].mxu0
        %v1388 = vpop.f32.mrb[0].mxu0
        %v1389 = vadd.f32 %v1322, %v1388
        %v1390 = vpop.f32.mrb[0].mxu0
        %1391 = vdwg.mxu0
        %v1392 = vpack.c.bf16 %v1381, %v1378
        %v1393 = vpack.c.bf16 %v1389, %v1386
        %1395 = vrot.lane.b32.xlu0 %v1392, 120
        %v1396 = vpop.permute.xlu0 %1395
        %1397 = vrot.lane.b32.xlu0 %v1392, 112
        %v1398 = vpop.permute.xlu0 %1397
        %vm1399 = vcmask 64512
        %v1401 = vsel %vm1399, %v1396, 0
        %v1404 = vsel %vm1399, %v1398, 0
        %1406 = vmatprep.subr.bf16.mxu0 0
        %1407 = vmatpush1.bf16.xpose.msra.mxu0 %v1404
        %1408 = vmatprep.subr.bf16.mxu0 0
        %1409 = vmatpush1.bf16.xpose.msra.mxu0 0
        %1410 = vmatprep.subr.bf16.mxu0 0
        %1411 = vmatpush1.bf16.xpose.msra.mxu0 0
        %1412 = vmatprep.subr.bf16.mxu0 0
        %1413 = vmatpush1.bf16.xpose.msra.mxu0 0
        %1414 = vmatprep.subr.bf16.mxu0 0
        %1415 = vmatpush1.bf16.xpose.msra.mxu0 0
        %1416 = vmatprep.subr.bf16.mxu0 0
        %1417 = vmatpush1.bf16.xpose.msra.mxu0 0
        %1418 = vmatprep.subr.bf16.mxu0 0
        %1419 = vmatpush1.bf16.xpose.msra.mxu0 0
        %1420 = vmatprep.subr.bf16.mxu0 0
        %1421 = vmatpush1.bf16.xpose.msra.mxu0 0
        %1422 = vmatprep.subr.bf16.mxu0 0
        %1423 = vmatpush1.bf16.xpose.msra.mxu0 0
        %1424 = vmatprep.subr.bf16.mxu0 0
        %1425 = vmatpush1.bf16.xpose.msra.mxu0 0
        %1426 = vmatprep.subr.bf16.mxu0 0
        %1427 = vmatpush1.bf16.xpose.msra.mxu0 0
        %1428 = vmatprep.subr.bf16.mxu0 0
        %1429 = vmatpush1.bf16.xpose.msra.mxu0 0
        %1430 = vmatprep.subr.bf16.mxu0 0
        %1431 = vmatpush1.bf16.xpose.msra.mxu0 0
        %1432 = vmatprep.subr.bf16.mxu0 0
        %1433 = vmatpush1.bf16.xpose.msra.mxu0 0
        %1434 = vmatprep.subr.bf16.mxu0 0
        %1435 = vmatpush1.bf16.xpose.msra.mxu0 0
        %1436 = vmatprep.subr.bf16.mxu0 0
        %1437 = vmatpush1.bf16.xpose.msra.mxu0 0
        %1438 = vmatprep.mubr.bf16.mxu0 0
        %1439 = vmatmul.mubr.bf16.gmra.mrb[0].mxu0 %v1401
        %v1440 = vpop.f32.mrb[0].mxu0
        %v1441 = vadd.f32 0.0, %v1440
        %v1442 = vpop.f32.mrb[0].mxu0
        %v1443 = vpop.f32.mrb[0].mxu0
        %v1444 = vadd.f32 0.0, %v1443
        %v1445 = vpop.f32.mrb[0].mxu0
        %1446 = vdwg.mxu0
        %1448 = vrot.lane.b32.xlu0 %v1393, 120
        %v1449 = vpop.permute.xlu0 %1448
        %1450 = vrot.lane.b32.xlu0 %v1393, 112
        %v1451 = vpop.permute.xlu0 %1450
        %v1453 = vsel %vm1399, %v1449, 0
        %v1456 = vsel %vm1399, %v1451, 0
        %1458 = vmatprep.subr.bf16.mxu0 0
        %1459 = vmatpush1.bf16.xpose.msra.mxu0 %v1456
        %1460 = vmatprep.subr.bf16.mxu0 0
        %1461 = vmatpush1.bf16.xpose.msra.mxu0 0
        %1462 = vmatprep.subr.bf16.mxu0 0
        %1463 = vmatpush1.bf16.xpose.msra.mxu0 0
        %1464 = vmatprep.subr.bf16.mxu0 0
        %1465 = vmatpush1.bf16.xpose.msra.mxu0 0
        %1466 = vmatprep.subr.bf16.mxu0 0
        %1467 = vmatpush1.bf16.xpose.msra.mxu0 0
        %1468 = vmatprep.subr.bf16.mxu0 0
        %1469 = vmatpush1.bf16.xpose.msra.mxu0 0
        %1470 = vmatprep.subr.bf16.mxu0 0
        %1471 = vmatpush1.bf16.xpose.msra.mxu0 0
        %1472 = vmatprep.subr.bf16.mxu0 0
        %1473 = vmatpush1.bf16.xpose.msra.mxu0 0
        %1474 = vmatprep.subr.bf16.mxu0 0
        %1475 = vmatpush1.bf16.xpose.msra.mxu0 0
        %1476 = vmatprep.subr.bf16.mxu0 0
        %1477 = vmatpush1.bf16.xpose.msra.mxu0 0
        %1478 = vmatprep.subr.bf16.mxu0 0
        %1479 = vmatpush1.bf16.xpose.msra.mxu0 0
        %1480 = vmatprep.subr.bf16.mxu0 0
        %1481 = vmatpush1.bf16.xpose.msra.mxu0 0
        %1482 = vmatprep.subr.bf16.mxu0 0
        %1483 = vmatpush1.bf16.xpose.msra.mxu0 0
        %1484 = vmatprep.subr.bf16.mxu0 0
        %1485 = vmatpush1.bf16.xpose.msra.mxu0 0
        %1486 = vmatprep.subr.bf16.mxu0 0
        %1487 = vmatpush1.bf16.xpose.msra.mxu0 0
        %1488 = vmatprep.subr.bf16.mxu0 0
        %1489 = vmatpush1.bf16.xpose.msra.mxu0 0
        %1490 = vmatprep.mubr.bf16.mxu0 0
        %1491 = vmatmul.mubr.bf16.gmra.mrb[0].mxu0 %v1453
        %v1492 = vpop.f32.mrb[0].mxu0
        %v1493 = vadd.f32 0.0, %v1492
        %v1494 = vpop.f32.mrb[0].mxu0
        %v1495 = vpop.f32.mrb[0].mxu0
        %v1496 = vadd.f32 0.0, %v1495
        %v1497 = vpop.f32.mrb[0].mxu0
        %1498 = vdwg.mxu0
        %v1499 = vpack.c.bf16 %v1444, %v1441
        %v1500 = vpack.c.bf16 %v1496, %v1493
        %v1502 = vsel %vm1336, %v1499, 0
        %1504 = vmatprep.subr.bf16.mxu0 0
        %1505 = vmatpush1.bf16.msra.mxu0 %v1392
        %1506 = vmatprep.subr.bf16.mxu0 0
        %1507 = vmatpush1.bf16.msra.mxu0 0
        %1508 = vmatprep.subr.bf16.mxu0 0
        %1509 = vmatpush1.bf16.msra.mxu0 0
        %1510 = vmatprep.subr.bf16.mxu0 0
        %1511 = vmatpush1.bf16.msra.mxu0 0
        %1512 = vmatprep.subr.bf16.mxu0 0
        %1513 = vmatpush1.bf16.msra.mxu0 0
        %1514 = vmatprep.subr.bf16.mxu0 0
        %1515 = vmatpush1.bf16.msra.mxu0 0
        %1516 = vmatprep.subr.bf16.mxu0 0
        %1517 = vmatpush1.bf16.msra.mxu0 0
        %1518 = vmatprep.subr.bf16.mxu0 0
        %1519 = vmatpush1.bf16.msra.mxu0 0
        %1520 = vmatprep.subr.bf16.mxu0 0
        %1521 = vmatpush1.bf16.msra.mxu0 0
        %1522 = vmatprep.subr.bf16.mxu0 0
        %1523 = vmatpush1.bf16.msra.mxu0 0
        %1524 = vmatprep.subr.bf16.mxu0 0
        %1525 = vmatpush1.bf16.msra.mxu0 0
        %1526 = vmatprep.subr.bf16.mxu0 0
        %1527 = vmatpush1.bf16.msra.mxu0 0
        %1528 = vmatprep.subr.bf16.mxu0 0
        %1529 = vmatpush1.bf16.msra.mxu0 0
        %1530 = vmatprep.subr.bf16.mxu0 0
        %1531 = vmatpush1.bf16.msra.mxu0 0
        %1532 = vmatprep.subr.bf16.mxu0 0
        %1533 = vmatpush1.bf16.msra.mxu0 0
        %1534 = vmatprep.subr.bf16.mxu0 0
        %1535 = vmatpush1.bf16.msra.mxu0 0
        %1536 = vmatprep.mubr.bf16.mxu0 0
        %1537 = vmatmul.mubr.bf16.gmra.mrb[0].mxu0 %v1502
        %v1538 = vpop.f32.mrb[0].mxu0
        %v1539 = vadd.f32 0.0, %v1538
        %v1540 = vpop.f32.mrb[0].mxu0
        %v1541 = vpop.f32.mrb[0].mxu0
        %v1542 = vadd.f32 0.0, %v1541
        %v1543 = vpop.f32.mrb[0].mxu0
        %1544 = vdwg.mxu0
        %v1546 = vsel %vm1336, %v1500, 0
        %1548 = vmatprep.subr.bf16.mxu0 0
        %1549 = vmatpush1.bf16.msra.mxu0 %v1393
        %1550 = vmatprep.subr.bf16.mxu0 0
        %1551 = vmatpush1.bf16.msra.mxu0 0
        %1552 = vmatprep.subr.bf16.mxu0 0
        %1553 = vmatpush1.bf16.msra.mxu0 0
        %1554 = vmatprep.subr.bf16.mxu0 0
        %1555 = vmatpush1.bf16.msra.mxu0 0
        %1556 = vmatprep.subr.bf16.mxu0 0
        %1557 = vmatpush1.bf16.msra.mxu0 0
        %1558 = vmatprep.subr.bf16.mxu0 0
        %1559 = vmatpush1.bf16.msra.mxu0 0
        %1560 = vmatprep.subr.bf16.mxu0 0
        %1561 = vmatpush1.bf16.msra.mxu0 0
        %1562 = vmatprep.subr.bf16.mxu0 0
        %1563 = vmatpush1.bf16.msra.mxu0 0
        %1564 = vmatprep.subr.bf16.mxu0 0
        %1565 = vmatpush1.bf16.msra.mxu0 0
        %1566 = vmatprep.subr.bf16.mxu0 0
        %1567 = vmatpush1.bf16.msra.mxu0 0
        %1568 = vmatprep.subr.bf16.mxu0 0
        %1569 = vmatpush1.bf16.msra.mxu0 0
        %1570 = vmatprep.subr.bf16.mxu0 0
        %1571 = vmatpush1.bf16.msra.mxu0 0
        %1572 = vmatprep.subr.bf16.mxu0 0
        %1573 = vmatpush1.bf16.msra.mxu0 0
        %1574 = vmatprep.subr.bf16.mxu0 0
        %1575 = vmatpush1.bf16.msra.mxu0 0
        %1576 = vmatprep.subr.bf16.mxu0 0
        %1577 = vmatpush1.bf16.msra.mxu0 0
        %1578 = vmatprep.subr.bf16.mxu0 0
        %1579 = vmatpush1.bf16.msra.mxu0 0
        %1580 = vmatprep.mubr.bf16.mxu0 0
        %1581 = vmatmul.mubr.bf16.gmra.mrb[0].mxu0 %v1546
        %v1582 = vpop.f32.mrb[0].mxu0
        %v1583 = vadd.f32 0.0, %v1582
        %v1584 = vpop.f32.mrb[0].mxu0
        %v1585 = vpop.f32.mrb[0].mxu0
        %v1586 = vadd.f32 0.0, %v1585
        %v1587 = vpop.f32.mrb[0].mxu0
        %1588 = vdwg.mxu0
        %v1589 = vpack.c.bf16 %v1542, %v1539
        %v1590 = vpack.c.bf16 %v1586, %v1583
        %v1591 = vld [vmem:[#allocation23] sm:$0xf]
        %v1592 = vld [vmem:[#allocation25] sm:$0x1]
        %v1594 = vlaneseq
        %v1595 = vshrl.u32 %v1594, 7
        %v1596 = vsub.s32 0, %v1595
        %v1597 = vrot.slane %v1592, %v1596
        %v1600 = vsel %vm1399, %v1589, 0
        %v1603 = vsel %vm1399, %v1590, 0
        %vm1605 = vcmask 1043456
        %v1607 = vsel %vm1605, %v1591, 0
        %1609 = vmatprep.subr.bf16.mxu0 0
        %1610 = vmatpush1.bf16.msra.mxu0 %v1607
        %1611 = vmatprep.subr.bf16.mxu0 0
        %1612 = vmatpush1.bf16.msra.mxu0 0
        %1613 = vmatprep.subr.bf16.mxu0 0
        %1614 = vmatpush1.bf16.msra.mxu0 0
        %1615 = vmatprep.subr.bf16.mxu0 0
        %1616 = vmatpush1.bf16.msra.mxu0 0
        %1617 = vmatprep.subr.bf16.mxu0 0
        %1618 = vmatpush1.bf16.msra.mxu0 0
        %1619 = vmatprep.subr.bf16.mxu0 0
        %1620 = vmatpush1.bf16.msra.mxu0 0
        %1621 = vmatprep.subr.bf16.mxu0 0
        %1622 = vmatpush1.bf16.msra.mxu0 0
        %1623 = vmatprep.subr.bf16.mxu0 0
        %1624 = vmatpush1.bf16.msra.mxu0 0
        %1625 = vmatprep.subr.bf16.mxu0 0
        %1626 = vmatpush1.bf16.msra.mxu0 0
        %1627 = vmatprep.subr.bf16.mxu0 0
        %1628 = vmatpush1.bf16.msra.mxu0 0
        %1629 = vmatprep.subr.bf16.mxu0 0
        %1630 = vmatpush1.bf16.msra.mxu0 0
        %1631 = vmatprep.subr.bf16.mxu0 0
        %1632 = vmatpush1.bf16.msra.mxu0 0
        %1633 = vmatprep.subr.bf16.mxu0 0
        %1634 = vmatpush1.bf16.msra.mxu0 0
        %1635 = vmatprep.subr.bf16.mxu0 0
        %1636 = vmatpush1.bf16.msra.mxu0 0
        %1637 = vmatprep.subr.bf16.mxu0 0
        %1638 = vmatpush1.bf16.msra.mxu0 0
        %1639 = vmatprep.subr.bf16.mxu0 0
        %1640 = vmatpush1.bf16.msra.mxu0 0
        %1641 = vmatprep.mubr.bf16.mxu0 0
        %1642 = vmatmul.mubr.bf16.gmra.mrb[0].mxu0 %v1600
        %v1643 = vpop.f32.mrb[0].mxu0
        %v1644 = vadd.f32 %v1597, %v1643
        %v1645 = vpop.f32.mrb[0].mxu0
        %v1646 = vpop.f32.mrb[0].mxu0
        %v1647 = vadd.f32 %v1597, %v1646
        %v1648 = vpop.f32.mrb[0].mxu0
        %1649 = vmatprep.mubr.bf16.mxu0 0
        %1650 = vmatmul.mubr.bf16.gmra.mrb[0].mxu0 %v1603
        %v1651 = vpop.f32.mrb[0].mxu0
        %v1652 = vadd.f32 %v1597, %v1651
        %v1653 = vpop.f32.mrb[0].mxu0
        %v1654 = vpop.f32.mrb[0].mxu0
        %v1655 = vadd.f32 %v1597, %v1654
        %v1656 = vpop.f32.mrb[0].mxu0
        %1657 = vdwg.mxu0
        %v1658 = vld [vmem:[#allocation26] sm:$0x1]
        %v1660 = vlaneseq
        %v1661 = vshrl.u32 %v1660, 7
        %v1662 = vsub.s32 0, %v1661
        %v1663 = vrot.slane %v1658, %v1662
        %v1665 = vmul.f32 %v1644, %v1663
        %v1666 = vmul.f32 %v1647, %v1663
        %v1667 = vmul.f32 %v1652, %v1663
        %v1668 = vmul.f32 %v1655, %v1663
        %v1669 = vld [vmem:[#allocation28] sm:$0x1]
        %v1671 = vlaneseq
        %v1672 = vshrl.u32 %v1671, 7
        %v1673 = vsub.s32 0, %v1672
        %v1674 = vrot.slane %v1669, %v1673
        %v1676 = vadd.f32 %v1665, %v1674
        %v1677 = vadd.f32 %v1666, %v1674
        %v1678 = vadd.f32 %v1667, %v1674
        %v1679 = vadd.f32 %v1668, %v1674
        %1684 = vrot.lane.b32.xlu0 %v1309, 112
        %v1685 = vpop.permute.xlu0 %1684
        %1686 = vrot.lane.b32.xlu0 %v1310, 112
        %v1687 = vpop.permute.xlu0 %1686
        %1688 = vrot.lane.b32.xlu0 %v1311, 112
        %v1689 = vpop.permute.xlu0 %1688
        %1690 = vrot.lane.b32.xlu0 %v1312, 112
        %v1691 = vpop.permute.xlu0 %1690
        %v1696 = vadd.f32 %v1676, %v1685
        %v1697 = vadd.f32 %v1677, %v1687
        %v1698 = vadd.f32 %v1678, %v1689
        %v1699 = vadd.f32 %v1679, %v1691
        %v1700 = vpack.c.bf16 %v1081, %v1080
        %v1701 = vpack.c.bf16 %v1083, %v1082
        %v1702 = vld [vmem:[%s17] sm:$0xff]
        %v1703 = vld [vmem:[%s17 + $0x8] sm:$0xff]
        %v1704 = vpack.c.bf16 %v1200, %v1199
        %v1705 = vpack.c.bf16 %v1202, %v1201
        %s1706 = scalar_lea.vmem %s17, 16
        %v1707 = vld [vmem:[%s1706] sm:$0xff]
        %v1708 = vld [vmem:[%s1706 + $0x8] sm:$0xff]
        %v1711 = vunpack.c.l.b16 %v1707
        %v1712 = vunpack.c.h.b16 %v1707
        %v1713 = vunpack.c.l.b16 %v1708
        %v1714 = vunpack.c.h.b16 %v1708
        %v1715 = vpack.c.b16 %v1713, %v1711
        %v1716 = vpack.c.b16 %v1714, %v1712
        %v1720 = vsel %vm1336, %v1704, 0
        %v1723 = vsel %vm1336, %v1705, 0
        %1725 = vmatprep.subr.bf16.mxu0 %v1716
        %1726 = vmatpush1.bf16.msra.mxu0 %v1715
        %1727 = vmatprep.subr.bf16.mxu0 0
        %1728 = vmatpush1.bf16.msra.mxu0 0
        %1729 = vmatprep.subr.bf16.mxu0 0
        %1730 = vmatpush1.bf16.msra.mxu0 0
        %1731 = vmatprep.subr.bf16.mxu0 0
        %1732 = vmatpush1.bf16.msra.mxu0 0
        %1733 = vmatprep.subr.bf16.mxu0 0
        %1734 = vmatpush1.bf16.msra.mxu0 0
        %1735 = vmatprep.subr.bf16.mxu0 0
        %1736 = vmatpush1.bf16.msra.mxu0 0
        %1737 = vmatprep.subr.bf16.mxu0 0
        %1738 = vmatpush1.bf16.msra.mxu0 0
        %1739 = vmatprep.subr.bf16.mxu0 0
        %1740 = vmatpush1.bf16.msra.mxu0 0
        %1741 = vmatprep.subr.bf16.mxu0 0
        %1742 = vmatpush1.bf16.msra.mxu0 0
        %1743 = vmatprep.subr.bf16.mxu0 0
        %1744 = vmatpush1.bf16.msra.mxu0 0
        %1745 = vmatprep.subr.bf16.mxu0 0
        %1746 = vmatpush1.bf16.msra.mxu0 0
        %1747 = vmatprep.subr.bf16.mxu0 0
        %1748 = vmatpush1.bf16.msra.mxu0 0
        %1749 = vmatprep.subr.bf16.mxu0 0
        %1750 = vmatpush1.bf16.msra.mxu0 0
        %1751 = vmatprep.subr.bf16.mxu0 0
        %1752 = vmatpush1.bf16.msra.mxu0 0
        %1753 = vmatprep.subr.bf16.mxu0 0
        %1754 = vmatpush1.bf16.msra.mxu0 0
        %1755 = vmatprep.subr.bf16.mxu0 0
        %1756 = vmatpush1.bf16.msra.mxu0 0
        %1757 = vmatprep.mubr.bf16.mxu0 0
        %1758 = vmatmul.mubr.bf16.gmra.mrb[0].mxu0 %v1720
        %v1759 = vpop.f32.mrb[0].mxu0
        %v1760 = vadd.f32 0.0, %v1759
        %v1761 = vpop.f32.mrb[0].mxu0
        %v1762 = vadd.f32 0.0, %v1761
        %v1763 = vpop.f32.mrb[0].mxu0
        %v1764 = vadd.f32 0.0, %v1763
        %v1765 = vpop.f32.mrb[0].mxu0
        %v1766 = vadd.f32 0.0, %v1765
        %1767 = vmatprep.mubr.bf16.mxu0 0
        %1768 = vmatmul.mubr.bf16.gmra.mrb[0].mxu0 %v1723
        %v1769 = vpop.f32.mrb[0].mxu0
        %v1770 = vadd.f32 0.0, %v1769
        %v1771 = vpop.f32.mrb[0].mxu0
        %v1772 = vadd.f32 0.0, %v1771
        %v1773 = vpop.f32.mrb[0].mxu0
        %v1774 = vadd.f32 0.0, %v1773
        %v1775 = vpop.f32.mrb[0].mxu0
        %v1776 = vadd.f32 0.0, %v1775
        %1777 = vdwg.mxu0
        %v1780 = vunpack.c.l.b16 %v1702
        %v1781 = vunpack.c.h.b16 %v1702
        %v1782 = vunpack.c.l.b16 %v1703
        %v1783 = vunpack.c.h.b16 %v1703
        %v1784 = vpack.c.b16 %v1782, %v1780
        %v1785 = vpack.c.b16 %v1783, %v1781
        %v1789 = vsel %vm1336, %v1700, 0
        %v1792 = vsel %vm1336, %v1701, 0
        %1794 = vmatprep.subr.bf16.mxu0 %v1785
        %1795 = vmatpush1.bf16.msra.mxu0 %v1784
        %1796 = vmatprep.subr.bf16.mxu0 0
        %1797 = vmatpush1.bf16.msra.mxu0 0
        %1798 = vmatprep.subr.bf16.mxu0 0
        %1799 = vmatpush1.bf16.msra.mxu0 0
        %1800 = vmatprep.subr.bf16.mxu0 0
        %1801 = vmatpush1.bf16.msra.mxu0 0
        %1802 = vmatprep.subr.bf16.mxu0 0
        %1803 = vmatpush1.bf16.msra.mxu0 0
        %1804 = vmatprep.subr.bf16.mxu0 0
        %1805 = vmatpush1.bf16.msra.mxu0 0
        %1806 = vmatprep.subr.bf16.mxu0 0
        %1807 = vmatpush1.bf16.msra.mxu0 0
        %1808 = vmatprep.subr.bf16.mxu0 0
        %1809 = vmatpush1.bf16.msra.mxu0 0
        %1810 = vmatprep.subr.bf16.mxu0 0
        %1811 = vmatpush1.bf16.msra.mxu0 0
        %1812 = vmatprep.subr.bf16.mxu0 0
        %1813 = vmatpush1.bf16.msra.mxu0 0
        %1814 = vmatprep.subr.bf16.mxu0 0
        %1815 = vmatpush1.bf16.msra.mxu0 0
        %1816 = vmatprep.subr.bf16.mxu0 0
        %1817 = vmatpush1.bf16.msra.mxu0 0
        %1818 = vmatprep.subr.bf16.mxu0 0
        %1819 = vmatpush1.bf16.msra.mxu0 0
        %1820 = vmatprep.subr.bf16.mxu0 0
        %1821 = vmatpush1.bf16.msra.mxu0 0
        %1822 = vmatprep.subr.bf16.mxu0 0
        %1823 = vmatpush1.bf16.msra.mxu0 0
        %1824 = vmatprep.subr.bf16.mxu0 0
        %1825 = vmatpush1.bf16.msra.mxu0 0
        %1826 = vmatprep.mubr.bf16.mxu0 0
        %1827 = vmatmul.mubr.bf16.gmra.mrb[0].mxu0 %v1789
        %v1828 = vpop.f32.mrb[0].mxu0
        %v1829 = vadd.f32 %v1760, %v1828
        %v1830 = vpop.f32.mrb[0].mxu0
        %v1831 = vadd.f32 %v1762, %v1830
        %v1832 = vpop.f32.mrb[0].mxu0
        %v1833 = vadd.f32 %v1764, %v1832
        %v1834 = vpop.f32.mrb[0].mxu0
        %v1835 = vadd.f32 %v1766, %v1834
        %1836 = vmatprep.mubr.bf16.mxu0 0
        %1837 = vmatmul.mubr.bf16.gmra.mrb[0].mxu0 %v1792
        %v1838 = vpop.f32.mrb[0].mxu0
        %v1839 = vadd.f32 %v1770, %v1838
        %v1840 = vpop.f32.mrb[0].mxu0
        %v1841 = vadd.f32 %v1772, %v1840
        %v1842 = vpop.f32.mrb[0].mxu0
        %v1843 = vadd.f32 %v1774, %v1842
        %v1844 = vpop.f32.mrb[0].mxu0
        %v1845 = vadd.f32 %v1776, %v1844
        %1846 = vdwg.mxu0
        %v1847 = vpack.c.bf16 %v1306, %v1305
        %v1848 = vpack.c.bf16 %v1308, %v1307
        %s1849 = scalar_lea.vmem %s17, 32
        %v1850 = vld [vmem:[%s1849] sm:$0xff]
        %v1851 = vld [vmem:[%s1849 + $0x8] sm:$0xff]
        %v1854 = vunpack.c.l.b16 %v1850
        %v1855 = vunpack.c.h.b16 %v1850
        %v1856 = vunpack.c.l.b16 %v1851
        %v1857 = vunpack.c.h.b16 %v1851
        %v1858 = vpack.c.b16 %v1856, %v1854
        %v1859 = vpack.c.b16 %v1857, %v1855
        %v1863 = vsel %vm1336, %v1847, 0
        %v1866 = vsel %vm1336, %v1848, 0
        %1868 = vmatprep.subr.bf16.mxu0 %v1859
        %1869 = vmatpush1.bf16.msra.mxu0 %v1858
        %1870 = vmatprep.subr.bf16.mxu0 0
        %1871 = vmatpush1.bf16.msra.mxu0 0
        %1872 = vmatprep.subr.bf16.mxu0 0
        %1873 = vmatpush1.bf16.msra.mxu0 0
        %1874 = vmatprep.subr.bf16.mxu0 0
        %1875 = vmatpush1.bf16.msra.mxu0 0
        %1876 = vmatprep.subr.bf16.mxu0 0
        %1877 = vmatpush1.bf16.msra.mxu0 0
        %1878 = vmatprep.subr.bf16.mxu0 0
        %1879 = vmatpush1.bf16.msra.mxu0 0
        %1880 = vmatprep.subr.bf16.mxu0 0
        %1881 = vmatpush1.bf16.msra.mxu0 0
        %1882 = vmatprep.subr.bf16.mxu0 0
        %1883 = vmatpush1.bf16.msra.mxu0 0
        %1884 = vmatprep.subr.bf16.mxu0 0
        %1885 = vmatpush1.bf16.msra.mxu0 0
        %1886 = vmatprep.subr.bf16.mxu0 0
        %1887 = vmatpush1.bf16.msra.mxu0 0
        %1888 = vmatprep.subr.bf16.mxu0 0
        %1889 = vmatpush1.bf16.msra.mxu0 0
        %1890 = vmatprep.subr.bf16.mxu0 0
        %1891 = vmatpush1.bf16.msra.mxu0 0
        %1892 = vmatprep.subr.bf16.mxu0 0
        %1893 = vmatpush1.bf16.msra.mxu0 0
        %1894 = vmatprep.subr.bf16.mxu0 0
        %1895 = vmatpush1.bf16.msra.mxu0 0
        %1896 = vmatprep.subr.bf16.mxu0 0
        %1897 = vmatpush1.bf16.msra.mxu0 0
        %1898 = vmatprep.subr.bf16.mxu0 0
        %1899 = vmatpush1.bf16.msra.mxu0 0
        %1900 = vmatprep.mubr.bf16.mxu0 0
        %1901 = vmatmul.mubr.bf16.gmra.mrb[0].mxu0 %v1863
        %v1902 = vpop.f32.mrb[0].mxu0
        %v1903 = vadd.f32 0.0, %v1902
        %v1904 = vpop.f32.mrb[0].mxu0
        %v1905 = vadd.f32 0.0, %v1904
        %v1906 = vpop.f32.mrb[0].mxu0
        %v1907 = vadd.f32 0.0, %v1906
        %v1908 = vpop.f32.mrb[0].mxu0
        %v1909 = vadd.f32 0.0, %v1908
        %1910 = vmatprep.mubr.bf16.mxu0 0
        %1911 = vmatmul.mubr.bf16.gmra.mrb[0].mxu0 %v1866
        %v1912 = vpop.f32.mrb[0].mxu0
        %v1913 = vadd.f32 0.0, %v1912
        %v1914 = vpop.f32.mrb[0].mxu0
        %v1915 = vadd.f32 0.0, %v1914
        %v1916 = vpop.f32.mrb[0].mxu0
        %v1917 = vadd.f32 0.0, %v1916
        %v1918 = vpop.f32.mrb[0].mxu0
        %v1919 = vadd.f32 0.0, %v1918
        %1920 = vdwg.mxu0
        %v1921 = vadd.f32 %v1829, %v1903
        %v1922 = vadd.f32 %v1831, %v1905
        %v1923 = vadd.f32 %v1833, %v1907
        %v1924 = vadd.f32 %v1835, %v1909
        %v1925 = vadd.f32 %v1839, %v1913
        %v1926 = vadd.f32 %v1841, %v1915
        %v1927 = vadd.f32 %v1843, %v1917
        %v1928 = vadd.f32 %v1845, %v1919
        %v1929 = vpack.c.bf16 %v1697, %v1696
        %v1930 = vpack.c.bf16 %v1699, %v1698
        %s1931 = scalar_lea.vmem %s17, 48
        %v1932 = vld [vmem:[%s1931] sm:$0xff]
        %v1933 = vld [vmem:[%s1931 + $0x8] sm:$0xff]
        %v1936 = vunpack.c.l.b16 %v1932
        %v1937 = vunpack.c.h.b16 %v1932
        %v1938 = vunpack.c.l.b16 %v1933
        %v1939 = vunpack.c.h.b16 %v1933
        %v1940 = vpack.c.b16 %v1938, %v1936
        %v1941 = vpack.c.b16 %v1939, %v1937
        %v1945 = vsel %vm1336, %v1929, 0
        %v1948 = vsel %vm1336, %v1930, 0
        %1950 = vmatprep.subr.bf16.mxu0 %v1941
        %1951 = vmatpush1.bf16.msra.mxu0 %v1940
        %1952 = vmatprep.subr.bf16.mxu0 0
        %1953 = vmatpush1.bf16.msra.mxu0 0
        %1954 = vmatprep.subr.bf16.mxu0 0
        %1955 = vmatpush1.bf16.msra.mxu0 0
        %1956 = vmatprep.subr.bf16.mxu0 0
        %1957 = vmatpush1.bf16.msra.mxu0 0
        %1958 = vmatprep.subr.bf16.mxu0 0
        %1959 = vmatpush1.bf16.msra.mxu0 0
        %1960 = vmatprep.subr.bf16.mxu0 0
        %1961 = vmatpush1.bf16.msra.mxu0 0
        %1962 = vmatprep.subr.bf16.mxu0 0
        %1963 = vmatpush1.bf16.msra.mxu0 0
        %1964 = vmatprep.subr.bf16.mxu0 0
        %1965 = vmatpush1.bf16.msra.mxu0 0
        %1966 = vmatprep.subr.bf16.mxu0 0
        %1967 = vmatpush1.bf16.msra.mxu0 0
        %1968 = vmatprep.subr.bf16.mxu0 0
        %1969 = vmatpush1.bf16.msra.mxu0 0
        %1970 = vmatprep.subr.bf16.mxu0 0
        %1971 = vmatpush1.bf16.msra.mxu0 0
        %1972 = vmatprep.subr.bf16.mxu0 0
        %1973 = vmatpush1.bf16.msra.mxu0 0
        %1974 = vmatprep.subr.bf16.mxu0 0
        %1975 = vmatpush1.bf16.msra.mxu0 0
        %1976 = vmatprep.subr.bf16.mxu0 0
        %1977 = vmatpush1.bf16.msra.mxu0 0
        %1978 = vmatprep.subr.bf16.mxu0 0
        %1979 = vmatpush1.bf16.msra.mxu0 0
        %1980 = vmatprep.subr.bf16.mxu0 0
        %1981 = vmatpush1.bf16.msra.mxu0 0
        %1982 = vmatprep.mubr.bf16.mxu0 0
        %1983 = vmatmul.mubr.bf16.gmra.mrb[0].mxu0 %v1945
        %v1984 = vpop.f32.mrb[0].mxu0
        %v1985 = vadd.f32 0.0, %v1984
        %v1986 = vpop.f32.mrb[0].mxu0
        %v1987 = vadd.f32 0.0, %v1986
        %v1988 = vpop.f32.mrb[0].mxu0
        %v1989 = vadd.f32 0.0, %v1988
        %v1990 = vpop.f32.mrb[0].mxu0
        %v1991 = vadd.f32 0.0, %v1990
        %1992 = vmatprep.mubr.bf16.mxu0 0
        %1993 = vmatmul.mubr.bf16.gmra.mrb[0].mxu0 %v1948
        %v1994 = vpop.f32.mrb[0].mxu0
        %v1995 = vadd.f32 0.0, %v1994
        %v1996 = vpop.f32.mrb[0].mxu0
        %v1997 = vadd.f32 0.0, %v1996
        %v1998 = vpop.f32.mrb[0].mxu0
        %v1999 = vadd.f32 0.0, %v1998
        %v2000 = vpop.f32.mrb[0].mxu0
        %v2001 = vadd.f32 0.0, %v2000
        %2002 = vdwg.mxu0
        %v2003 = vadd.f32 %v1921, %v1985
        %v2004 = vadd.f32 %v1922, %v1987
        %v2005 = vadd.f32 %v1923, %v1989
        %v2006 = vadd.f32 %v1924, %v1991
        %v2007 = vadd.f32 %v1925, %v1995
        %v2008 = vadd.f32 %v1926, %v1997
        %v2009 = vadd.f32 %v1927, %v1999
        %v2010 = vadd.f32 %v1928, %v2001
        %v2011 = vrot.slane %v2003, 7
        %v2012 = vrot.slane %v2005, 7
        %v2013 = vrot.slane %v2007, 7
        %v2014 = vrot.slane %v2009, 7
        %v2015 = vsel %vm979, %v2013, %v2014
        %v2016 = vsel %vm979, %v2012, %v2013
        %v2017 = vsel %vm979, %v2011, %v2012
        %v2018 = vsel %vm979, %v2014, %v2011
        %v2019 = vsel %vm986, %v2018, 0.0
        %v2020 = vsel %vm987, %v2017, 0.0
        %v2021 = vsel %vm986, %v2016, 0.0
        %v2022 = vsel %vm987, %v2015, 0.0
        %2027 = vrot.lane.b32.xlu0 %v2003, 64
        %v2028 = vpop.permute.xlu0 %2027
        %2029 = vrot.lane.b32.xlu0 %v2005, 64
        %v2030 = vpop.permute.xlu0 %2029
        %2031 = vrot.lane.b32.xlu0 %v2007, 64
        %v2032 = vpop.permute.xlu0 %2031
        %2033 = vrot.lane.b32.xlu0 %v2009, 64
        %v2034 = vpop.permute.xlu0 %2033
        %v2039 = vadd.f32 %v2019, %v2028
        %v2040 = vadd.f32 %v2020, %v2030
        %v2041 = vadd.f32 %v2021, %v2032
        %v2042 = vadd.f32 %v2022, %v2034
        %v2043 = vrot.slane %v2004, 1
        %v2044 = vrot.slane %v2006, 1
        %v2045 = vrot.slane %v2008, 1
        %v2046 = vrot.slane %v2010, 1
        %v2047 = vsel %vm1014, %v2045, %v2046
        %v2048 = vsel %vm1014, %v2044, %v2045
        %v2049 = vsel %vm1014, %v2043, %v2044
        %v2050 = vsel %vm1014, %v2046, %v2043
        %v2051 = vsel %vm1021, %v2049, 0.0
        %v2052 = vsel %vm1022, %v2048, 0.0
        %v2053 = vsel %vm1021, %v2047, 0.0
        %v2054 = vsel %vm1022, %v2050, 0.0
        %v2055 = vadd.f32 %v2039, %v2051
        %v2056 = vadd.f32 %v2040, %v2052
        %v2057 = vadd.f32 %v2041, %v2053
        %v2058 = vadd.f32 %v2042, %v2054
        %v2059 = vmax.f32 %v2055, 0.0
        %v2060 = vmax.f32 %v2056, 0.0
        %v2061 = vmax.f32 %v2057, 0.0
        %v2062 = vmax.f32 %v2058, 0.0
        %v2063 = vld [vmem:[%s18] sm:$0x1]
        %v2065 = vlaneseq
        %v2066 = vshrl.u32 %v2065, 7
        %v2067 = vsub.s32 0, %v2066
        %v2068 = vrot.slane %v2063, %v2067
        %v2070 = vmul.f32 %v2059, %v2068
        %v2071 = vmul.f32 %v2060, %v2068
        %v2072 = vmul.f32 %v2061, %v2068
        %v2073 = vmul.f32 %v2062, %v2068
        %v2074 = vld [vmem:[%s19] sm:$0x1]
        %v2076 = vlaneseq
        %v2077 = vshrl.u32 %v2076, 7
        %v2078 = vsub.s32 0, %v2077
        %v2079 = vrot.slane %v2074, %v2078
        %v2081 = vadd.f32 %v2070, %v2079
        %v2082 = vadd.f32 %v2071, %v2079
        %v2083 = vadd.f32 %v2072, %v2079
        %v2084 = vadd.f32 %v2073, %v2079
        %v2085 = vadd.f32 %v2081, %v856
        %v2086 = vadd.f32 %v2082, %v857
        %v2087 = vadd.f32 %v2083, %v858
        %v2088 = vadd.f32 %v2084, %v859
        %2089 = vst.msk [vmem:[%s852] sm:$0xff] %vm913, %v2085
        %2090 = vst.msk [vmem:[%s852 + $0x8] sm:$0xff] %vm913, %v2086
        %2091 = vst.msk [vmem:[%s852 + $0x10] sm:$0xff] %vm913, %v2087
        %2092 = vst.msk [vmem:[%s852 + $0x18] sm:$0xff] %vm913, %v2088
        %s2093 = sand.u32 %s478, 1
        %s2094 = scalar_lea.sflag [#allocation4], %s2093
        %s2095 = sand.u32 %s478, 1
        %s2096 = smul.addr %s2095, 32
        %s2097 = scalar_lea.vmem [#allocation29], %s2096
        // Predicated region
        $region169: #{tpu_custom_call.1} parent=99 // pred_check
          %p2098 = pneg %p488
        $region170: #{tpu_custom_call.1} parent=99 // pred_check_branch
          %2100 = sbr.rel (%p2098) target = $region172
        $region171: #{tpu_custom_call.1} parent=99 // pred_region
          %s2101 = smul.u32 2, %s45
          %s2103 = ssub.s32 512, 512
          %2104 = vsyncadd %s2094, %s2103
          %s2105 = smul.addr %s2101, 2
          %s2106 = smul.addr %s2105, 128
          %s2107 = scalar_lea.hbm %s20, %s2106
          %s2108 = sshll.u32 %s2097, 4
          %s2109 = int_to_ptr.vmem [resolvable:$true] %s2108
          %2114 = dma.vmem_to_hbm [thread:$0]  %s2109, 512, %s2107, %s2094, 128, 128, 8
        $region172: #{tpu_custom_call.1} parent=99 // pred_fallthru
          _
      $region100: #{tpu_custom_call.1} parent=5 // pred_fallthru
        _
      %p2115 = scmp.le.s32.totalorder 2, %s40
      // Predicated region
      $region173: #{tpu_custom_call.1} parent=5 // pred_check
        %p2116 = pneg %p2115
      $region174: #{tpu_custom_call.1} parent=5 // pred_check_branch
        %2118 = sbr.rel (%p2116) target = $region176
      $region175: #{tpu_custom_call.1} parent=5 // pred_region
        %s2119 = ssub.s32 %s40, 2
        // Predicated region
        $region177: #{tpu_custom_call.1} parent=175 // pred_check
          %p2120 = pneg %p494
        $region178: #{tpu_custom_call.1} parent=175 // pred_check_branch
          %2122 = sbr.rel (%p2120) target = $region180
        $region179: #{tpu_custom_call.1} parent=175 // pred_region
          %s2123 = sand.u32 %s479, 1
          %s2124 = scalar_lea.sflag [#allocation4], %s2123
          %s2125 = sand.u32 %s479, 1
          %s2126 = smul.addr %s2125, 32
          %s2127 = scalar_lea.vmem [#allocation29], %s2126
          %2128 = dma.done %s2124, 512
        $region180: #{tpu_custom_call.1} parent=175 // pred_fallthru
          _
      $region176: #{tpu_custom_call.1} parent=5 // pred_fallthru
        _
    $region6: #{tpu_custom_call.1} parent=1 // loop_footer
      %s44 = sadd.s32 1, %s40
    $region7: #{tpu_custom_call.1} parent=1 // loop_footer_branch
      %39 = sbr.rel target = $region3
    $region8: #{tpu_custom_call.1} parent=1 // loop_exit
      _
    %2129 = vsyncpa [#allocation3], 1
    %s2130 = scalar_lea.sflag [#allocation3], 1
    %2131 = vsyncpa %s2130, 1
    %2132 = vsyncpa [#allocation6], 1
    %2133 = vsyncpa [#allocation9], 1
    %2134 = vsyncpa [#allocation12], 1
    %2135 = vsyncpa [#allocation15], 1
    %2136 = vsyncpa [#allocation18], 1
    %2137 = vsyncpa [#allocation21], 1
    %2138 = vsyncpa [#allocation24], 1
    %2139 = vsyncpa [#allocation27], 1
    %2140 = vsyncpa [#allocation4], 1
    %s2141 = scalar_lea.sflag [#allocation4], 1
    %2142 = vsyncpa %s2141, 1

</llo_original>
